<compile_context>
chip_gen: v6e
topology: v6e:2x2x1
jax: 0.10.0
libtpu: 0.0.40
codegen_flags: <defaults>
</compile_context>

<pallas_src>
import functools

import jax
import jax.numpy as jnp
from jax.experimental import pallas as pl
from jax.experimental.pallas import tpu as pltpu

LANE = 128
SUB = 16  # batch rows padded to a multiple of 16 (bf16 sublane pack)


def _round_up(x, m):
    return (x + m - 1) // m * m


def _pad2(a, rows, cols, dtype):
    a = jnp.asarray(a, jnp.float32)
    return jnp.pad(a, ((0, rows - a.shape[0]), (0, cols - a.shape[1]))).astype(dtype)


def _byol_fused_kernel(x1_ref, x2_ref,
                       w1f_ref, b1f_ref,                      # fused online||target first layer
                       w2o_ref, b2o_ref,                      # online encoder second layer
                       w1p_ref, b1p_ref, w2p_ref, b2p_ref,    # predictor
                       w2t_ref, b2t_ref,                      # target encoder second layer
                       out_ref,
                       *, d_hid_p, d_proj_p):
    """out[:, 0:P]=pred(enc(x1)), [:,P:2P]=target(x1), [:,2P:3P]=pred(enc(x2)), [:,3P:4P]=target(x2).

    bf16 at the MXU, f32 accumulation / bias / ReLU. All lane dims 128-padded.
    """
    w1f = w1f_ref[...]
    b1f = b1f_ref[...]

    def run_view(x_bf16, col0):
        # Fused first layer: online & target encoders share the LHS -> one
        # N = 2*d_hid_p matmul (fills a 256-wide MXU tile on v6e/v7x).
        hz = jnp.dot(x_bf16, w1f, preferred_element_type=jnp.float32) + b1f
        hz = jnp.maximum(hz, 0.0)
        h = hz[:, :d_hid_p]        # online encoder hidden (128-aligned lane slice)
        ht = hz[:, d_hid_p:]       # target encoder hidden

        # Online encoder projection.
        z = jnp.dot(h.astype(jnp.bfloat16), w2o_ref[...],
                    preferred_element_type=jnp.float32) + b2o_ref[...]
        # Online predictor: Linear -> ReLU -> Linear.
        hp = jnp.dot(z.astype(jnp.bfloat16), w1p_ref[...],
                     preferred_element_type=jnp.float32) + b1p_ref[...]
        hp = jnp.maximum(hp, 0.0)
        p = jnp.dot(hp.astype(jnp.bfloat16), w2p_ref[...],
                    preferred_element_type=jnp.float32) + b2p_ref[...]
        # Target encoder projection (no-grad branch in PyTorch; same math fwd).
        zt = jnp.dot(ht.astype(jnp.bfloat16), w2t_ref[...],
                     preferred_element_type=jnp.float32) + b2t_ref[...]

        # 128-lane-aligned, unmasked stores into the single output slab.
        out_ref[:, col0:col0 + d_proj_p] = p.astype(out_ref.dtype)
        out_ref[:, col0 + d_proj_p:col0 + 2 * d_proj_p] = zt.astype(out_ref.dtype)

    run_view(x1_ref[...], 0)
    run_view(x2_ref[...], 2 * d_proj_p)


def _byol_pallas_call(x1, x2, params, *, d_in_p, d_hid_p, d_proj_p, m_tile):
    """x1, x2: [Bp, d_in_p] bf16 (batch already padded to a multiple of m_tile)."""
    Bp = x1.shape[0]
    n_blocks = Bp // m_tile
    out_w = 4 * d_proj_p
    args = (x1, x2, *params)

    def const_spec(a):
        nd = a.ndim
        return pl.BlockSpec(a.shape, lambda i, _nd=nd: (0,) * _nd)  # weights stay resident

    in_specs = [
        pl.BlockSpec((m_tile, d_in_p), lambda i: (i, 0)),   # x1 batch block
        pl.BlockSpec((m_tile, d_in_p), lambda i: (i, 0)),   # x2 batch block
    ] + [const_spec(p) for p in params]

    # 2 views; per row: fused first layer + (enc2, pred1, pred2, target2).
    flops = 2 * Bp * 2 * (d_in_p * 2 * d_hid_p
                          + 3 * d_hid_p * d_proj_p
                          + d_proj_p * d_hid_p)
    bytes_accessed = (sum(int(a.size) * a.dtype.itemsize for a in args)
                      + Bp * out_w * 4)

    return pl.pallas_call(
        functools.partial(_byol_fused_kernel, d_hid_p=d_hid_p, d_proj_p=d_proj_p),
        out_shape=jax.ShapeDtypeStruct((Bp, out_w), jnp.float32),
        grid=(n_blocks,),
        in_specs=in_specs,
        out_specs=pl.BlockSpec((m_tile, out_w), lambda i: (i, 0)),
        cost_estimate=pl.CostEstimate(flops=flops, transcendentals=0,
                                      bytes_accessed=bytes_accessed),
        compiler_params=pltpu.CompilerParams(
            dimension_semantics=("parallel",),
            vmem_limit_bytes=32 * 1024 * 1024),
    )(*args)


def init_mlp_params(key, d_in, d_hid, d_out, scale=0.02):
    k1, k2 = jax.random.split(key)
    w1 = scale * jax.random.normal(k1, (d_in, d_hid), jnp.float32)
    b1 = jnp.zeros((1, d_hid), jnp.float32)
    w2 = scale * jax.random.normal(k2, (d_hid, d_out), jnp.float32)
    b2 = jnp.zeros((1, d_out), jnp.float32)
    return (w1, b1, w2, b2)


class BYOLNetPallas:
    """JAX/Pallas mirror of BYOL_net.forward().

    online_net / target_net : Linear(d_in -> d_hid) -> ReLU -> Linear(d_hid -> d_proj)
    online_predictor        : Linear(d_proj -> d_hid) -> ReLU -> Linear(d_hid -> d_proj)
    """

    def __init__(self, online_params, predictor_params, target_params, momentum=0.999):
        # momentum is only used by the training-time EMA (update_target_param);
        # the forward pass does not touch it.
        self.momentum = momentum
        d_in, d_hid = online_params[0].shape
        d_proj = online_params[2].shape[1]
        self.d_in, self.d_hid, self.d_proj = d_in, d_hid, d_proj
        self.d_in_p = _round_up(d_in, LANE)
        self.d_hid_p = _round_up(d_hid, LANE)
        self.d_proj_p = _round_up(d_proj, LANE)

        w1o, b1o, w2o, b2o = online_params
        w1t, b1t, w2t, b2t = target_params
        w1p, b1p, w2p, b2p = predictor_params

        # Fuse the two shared-LHS first layers (online || target) along the
        # output dim; zero padding is numerically exact (extra hidden units are
        # relu(0)=0 and feed zero weight rows downstream).
        w1f = jnp.concatenate([
            _pad2(w1o, self.d_in_p, self.d_hid_p, jnp.bfloat16),
            _pad2(w1t, self.d_in_p, self.d_hid_p, jnp.bfloat16)], axis=1)
        b1f = jnp.concatenate([
            _pad2(b1o.reshape(1, -1), 1, self.d_hid_p, jnp.float32),
            _pad2(b1t.reshape(1, -1), 1, self.d_hid_p, jnp.float32)], axis=1)

        self._params = (
            w1f, b1f,
            _pad2(w2o, self.d_hid_p, self.d_proj_p, jnp.bfloat16),
            _pad2(b2o.reshape(1, -1), 1, self.d_proj_p, jnp.float32),
            _pad2(w1p, self.d_proj_p, self.d_hid_p, jnp.bfloat16),
            _pad2(b1p.reshape(1, -1), 1, self.d_hid_p, jnp.float32),
            _pad2(w2p, self.d_hid_p, self.d_proj_p, jnp.bfloat16),
            _pad2(b2p.reshape(1, -1), 1, self.d_proj_p, jnp.float32),
            _pad2(w2t, self.d_hid_p, self.d_proj_p, jnp.bfloat16),
            _pad2(b2t.reshape(1, -1), 1, self.d_proj_p, jnp.float32),
        )

    def _flatten(self, x, b_pad):
        # NCHW -> [B, C*H*W] row-major (like torch.flatten(x, 1)); cast to bf16
        # (kernel MXU dtype -> halves activation DMA), pad lanes to 128 and
        # batch rows to b_pad so all loads/stores are full vregs.
        B = x.shape[0]
        xf = x.reshape(B, -1).astype(jnp.bfloat16)
        return jnp.pad(xf, ((0, b_pad - B), (0, self.d_in_p - xf.shape[1])))

    def forward(self, x1, x2):
        B = x1.shape[0]
        m_tile = min(256, _round_up(B, SUB))     # batch tile (multiple of 16)
        b_pad = _round_up(B, m_tile)
        out = _byol_pallas_call(
            self._flatten(x1, b_pad), self._flatten(x2, b_pad), self._params,
            d_in_p=self.d_in_p, d_hid_p=self.d_hid_p, d_proj_p=self.d_proj_p,
            m_tile=m_tile)
        d, P = self.d_proj, self.d_proj_p
        x1_online = out[:B, 0:d]
        x1_target = out[:B, P:P + d]
        x2_online = out[:B, 2 * P:2 * P + d]
        x2_target = out[:B, 3 * P:3 * P + d]
        # Same ordering as the PyTorch module.
        return (x1_online, x2_target, x2_online, x1_target)


if __name__ == "__main__":
    B, C, H, W = 2, 4, 16, 16
    d_in = C * H * W      # 1024
    d_hid = 32
    d_proj = 32

    key = jax.random.PRNGKey(0)
    k_x1, k_x2, k_online, k_pred = jax.random.split(key, 4)

    x1 = jax.random.normal(k_x1, (B, C, H, W), jnp.float32)
    x2 = jax.random.normal(k_x2, (B, C, H, W), jnp.float32)

    online_params = init_mlp_params(k_online, d_in, d_hid, d_proj)
    predictor_params = init_mlp_params(k_pred, d_proj, d_hid, d_proj)
    # init_target_param: target <- copy of online, frozen.
    target_params = tuple(jnp.array(p) for p in online_params)

    model = BYOLNetPallas(online_params, predictor_params, target_params, momentum=0.999)
    outs = jax.block_until_ready(model.forward(x1, x2))

    # Pure-JAX reference emulating the kernel numerics (bf16 MXU inputs, f32 accum).
    def ref_mlp2(x, w1, b1, w2, b2):
        h = jnp.dot(x.astype(jnp.bfloat16), w1.astype(jnp.bfloat16),
                    preferred_element_type=jnp.float32) + b1
        h = jnp.maximum(h, 0.0)
        return jnp.dot(h.astype(jnp.bfloat16), w2.astype(jnp.bfloat16),
                       preferred_element_type=jnp.float32) + b2

    x1f = x1.reshape(B, -1)
    x2f = x2.reshape(B, -1)
    ref_enc1 = ref_mlp2(x1f, *online_params)
    ref_enc2 = ref_mlp2(x2f, *online_params)
    refs = (
        ref_mlp2(ref_enc1, *predictor_params),   # x1_online_output
        ref_mlp2(x2f, *target_params),           # x2_target_output
        ref_mlp2(ref_enc2, *predictor_params),   # x2_online_output
        ref_mlp2(x1f, *target_params),           # x1_target_output
    )
    for o, r in zip(outs, refs):
        assert o.shape == (B, d_proj), o.shape
        assert jnp.allclose(o, r, atol=2e-3, rtol=2e-3), float(jnp.max(jnp.abs(o - r)))

    print("KERNEL_OK")
</pallas_src>

<mosaic_0001>
module attributes {stable_mosaic.version = 11 : i64} {
  func.func @_byol_fused_kernel(%arg0: i32, %arg1: memref<16x1024xbf16, #tpu.memory_space<vmem>>, %arg2: memref<16x1024xbf16, #tpu.memory_space<vmem>>, %arg3: memref<1024x256xbf16, #tpu.memory_space<vmem>>, %arg4: memref<1x256xf32, #tpu.memory_space<vmem>>, %arg5: memref<128x128xbf16, #tpu.memory_space<vmem>>, %arg6: memref<1x128xf32, #tpu.memory_space<vmem>>, %arg7: memref<128x128xbf16, #tpu.memory_space<vmem>>, %arg8: memref<1x128xf32, #tpu.memory_space<vmem>>, %arg9: memref<128x128xbf16, #tpu.memory_space<vmem>>, %arg10: memref<1x128xf32, #tpu.memory_space<vmem>>, %arg11: memref<128x128xbf16, #tpu.memory_space<vmem>>, %arg12: memref<1x128xf32, #tpu.memory_space<vmem>>, %arg13: memref<16x512xf32, #tpu.memory_space<vmem>>) attributes {dimension_semantics = [#tpu.dimension_semantics<parallel>], iteration_bounds = array<i64: 1>, scalar_prefetch = 0 : i64, scratch_operands = 0 : i64, tpu.core_type = #tpu.core_type<tc>, window_params = [{transform_indices = @transform_0, window_bounds = array<i64: 16, 1024>}, {transform_indices = @transform_1, window_bounds = array<i64: 16, 1024>}, {pipeline_mode = #tpu.pipeline_mode<synchronous>, transform_indices = @transform_2, window_bounds = array<i64: 1024, 256>}, {pipeline_mode = #tpu.pipeline_mode<synchronous>, transform_indices = @transform_3, window_bounds = array<i64: 1, 256>}, {pipeline_mode = #tpu.pipeline_mode<synchronous>, transform_indices = @transform_4, window_bounds = array<i64: 128, 128>}, {pipeline_mode = #tpu.pipeline_mode<synchronous>, transform_indices = @transform_5, window_bounds = array<i64: 1, 128>}, {pipeline_mode = #tpu.pipeline_mode<synchronous>, transform_indices = @transform_6, window_bounds = array<i64: 128, 128>}, {pipeline_mode = #tpu.pipeline_mode<synchronous>, transform_indices = @transform_7, window_bounds = array<i64: 1, 128>}, {pipeline_mode = #tpu.pipeline_mode<synchronous>, transform_indices = @transform_8, window_bounds = array<i64: 128, 128>}, {pipeline_mode = #tpu.pipeline_mode<synchronous>, transform_indices = @transform_9, window_bounds = array<i64: 1, 128>}, {pipeline_mode = #tpu.pipeline_mode<synchronous>, transform_indices = @transform_10, window_bounds = array<i64: 128, 128>}, {pipeline_mode = #tpu.pipeline_mode<synchronous>, transform_indices = @transform_11, window_bounds = array<i64: 1, 128>}, {transform_indices = @transform_12, window_bounds = array<i64: 16, 512>}]} {
    %c0 = arith.constant 0 : index
    %c0_0 = arith.constant 0 : index
    %0 = vector.load %arg3[%c0, %c0_0] : memref<1024x256xbf16, #tpu.memory_space<vmem>>, vector<1024x256xbf16>
    %c0_1 = arith.constant 0 : index
    %c0_2 = arith.constant 0 : index
    %1 = vector.load %arg4[%c0_1, %c0_2] : memref<1x256xf32, #tpu.memory_space<vmem>>, vector<1x256xf32>
    %c0_3 = arith.constant 0 : index
    %c0_4 = arith.constant 0 : index
    %2 = vector.load %arg1[%c0_3, %c0_4] : memref<16x1024xbf16, #tpu.memory_space<vmem>>, vector<16x1024xbf16>
    %cst = arith.constant dense<0.000000e+00> : vector<16x256xf32>
    %3 = tpu.matmul %2, %0, %cst {dimension_numbers = #tpu.dot_dimension_numbers<[1], [0], [0], [1], [0, 0, 1, 1], [], []>} : vector<16x1024xbf16>, vector<1024x256xbf16>, vector<16x256xf32> -> vector<16x256xf32>
    %4 = vector.broadcast %1 : vector<1x256xf32> to vector<16x256xf32>
    %5 = arith.addf %3, %4 : vector<16x256xf32>
    %cst_5 = arith.constant 0.000000e+00 : f32
    %6 = vector.broadcast %cst_5 : f32 to vector<16x256xf32>
    %7 = arith.maximumf %5, %6 : vector<16x256xf32>
    %8 = vector.extract_strided_slice %7 {offsets = [0, 0], sizes = [16, 128], strides = [1, 1]} : vector<16x256xf32> to vector<16x128xf32>
    %9 = vector.extract_strided_slice %7 {offsets = [0, 128], sizes = [16, 128], strides = [1, 1]} : vector<16x256xf32> to vector<16x128xf32>
    %10 = arith.truncf %8 : vector<16x128xf32> to vector<16x128xbf16>
    %c0_6 = arith.constant 0 : index
    %c0_7 = arith.constant 0 : index
    %11 = vector.load %arg5[%c0_6, %c0_7] : memref<128x128xbf16, #tpu.memory_space<vmem>>, vector<128x128xbf16>
    %cst_8 = arith.constant dense<0.000000e+00> : vector<16x128xf32>
    %12 = tpu.matmul %10, %11, %cst_8 {dimension_numbers = #tpu.dot_dimension_numbers<[1], [0], [0], [1], [0, 0, 1, 1], [], []>} : vector<16x128xbf16>, vector<128x128xbf16>, vector<16x128xf32> -> vector<16x128xf32>
    %c0_9 = arith.constant 0 : index
    %c0_10 = arith.constant 0 : index
    %13 = vector.load %arg6[%c0_9, %c0_10] : memref<1x128xf32, #tpu.memory_space<vmem>>, vector<1x128xf32>
    %14 = vector.broadcast %13 : vector<1x128xf32> to vector<16x128xf32>
    %15 = arith.addf %12, %14 : vector<16x128xf32>
    %16 = arith.truncf %15 : vector<16x128xf32> to vector<16x128xbf16>
    %c0_11 = arith.constant 0 : index
    %c0_12 = arith.constant 0 : index
    %17 = vector.load %arg7[%c0_11, %c0_12] : memref<128x128xbf16, #tpu.memory_space<vmem>>, vector<128x128xbf16>
    %cst_13 = arith.constant dense<0.000000e+00> : vector<16x128xf32>
    %18 = tpu.matmul %16, %17, %cst_13 {dimension_numbers = #tpu.dot_dimension_numbers<[1], [0], [0], [1], [0, 0, 1, 1], [], []>} : vector<16x128xbf16>, vector<128x128xbf16>, vector<16x128xf32> -> vector<16x128xf32>
    %c0_14 = arith.constant 0 : index
    %c0_15 = arith.constant 0 : index
    %19 = vector.load %arg8[%c0_14, %c0_15] : memref<1x128xf32, #tpu.memory_space<vmem>>, vector<1x128xf32>
    %20 = vector.broadcast %19 : vector<1x128xf32> to vector<16x128xf32>
    %21 = arith.addf %18, %20 : vector<16x128xf32>
    %cst_16 = arith.constant 0.000000e+00 : f32
    %22 = vector.broadcast %cst_16 : f32 to vector<16x128xf32>
    %23 = arith.maximumf %21, %22 : vector<16x128xf32>
    %24 = arith.truncf %23 : vector<16x128xf32> to vector<16x128xbf16>
    %c0_17 = arith.constant 0 : index
    %c0_18 = arith.constant 0 : index
    %25 = vector.load %arg9[%c0_17, %c0_18] : memref<128x128xbf16, #tpu.memory_space<vmem>>, vector<128x128xbf16>
    %cst_19 = arith.constant dense<0.000000e+00> : vector<16x128xf32>
    %26 = tpu.matmul %24, %25, %cst_19 {dimension_numbers = #tpu.dot_dimension_numbers<[1], [0], [0], [1], [0, 0, 1, 1], [], []>} : vector<16x128xbf16>, vector<128x128xbf16>, vector<16x128xf32> -> vector<16x128xf32>
    %c0_20 = arith.constant 0 : index
    %c0_21 = arith.constant 0 : index
    %27 = vector.load %arg10[%c0_20, %c0_21] : memref<1x128xf32, #tpu.memory_space<vmem>>, vector<1x128xf32>
    %28 = vector.broadcast %27 : vector<1x128xf32> to vector<16x128xf32>
    %29 = arith.addf %26, %28 : vector<16x128xf32>
    %30 = arith.truncf %9 : vector<16x128xf32> to vector<16x128xbf16>
    %c0_22 = arith.constant 0 : index
    %c0_23 = arith.constant 0 : index
    %31 = vector.load %arg11[%c0_22, %c0_23] : memref<128x128xbf16, #tpu.memory_space<vmem>>, vector<128x128xbf16>
    %cst_24 = arith.constant dense<0.000000e+00> : vector<16x128xf32>
    %32 = tpu.matmul %30, %31, %cst_24 {dimension_numbers = #tpu.dot_dimension_numbers<[1], [0], [0], [1], [0, 0, 1, 1], [], []>} : vector<16x128xbf16>, vector<128x128xbf16>, vector<16x128xf32> -> vector<16x128xf32>
    %c0_25 = arith.constant 0 : index
    %c0_26 = arith.constant 0 : index
    %33 = vector.load %arg12[%c0_25, %c0_26] : memref<1x128xf32, #tpu.memory_space<vmem>>, vector<1x128xf32>
    %34 = vector.broadcast %33 : vector<1x128xf32> to vector<16x128xf32>
    %35 = arith.addf %32, %34 : vector<16x128xf32>
    %c0_27 = arith.constant 0 : index
    %c0_28 = arith.constant 0 : index
    %36 = vector.load %arg13[%c0_27, %c0_28] : memref<16x512xf32, #tpu.memory_space<vmem>>, vector<16x128xf32>
    tpu.vector_store %arg13[%c0_27, %c0_28], %29 {strides = array<i32>} : memref<16x512xf32, #tpu.memory_space<vmem>>, vector<16x128xf32>,
    %c0_29 = arith.constant 0 : index
    %c128 = arith.constant 128 : index
    %37 = vector.load %arg13[%c0_29, %c128] : memref<16x512xf32, #tpu.memory_space<vmem>>, vector<16x128xf32>
    tpu.vector_store %arg13[%c0_29, %c128], %35 {strides = array<i32>} : memref<16x512xf32, #tpu.memory_space<vmem>>, vector<16x128xf32>,
    %c0_30 = arith.constant 0 : index
    %c0_31 = arith.constant 0 : index
    %38 = vector.load %arg2[%c0_30, %c0_31] : memref<16x1024xbf16, #tpu.memory_space<vmem>>, vector<16x1024xbf16>
    %cst_32 = arith.constant dense<0.000000e+00> : vector<16x256xf32>
    %39 = tpu.matmul %38, %0, %cst_32 {dimension_numbers = #tpu.dot_dimension_numbers<[1], [0], [0], [1], [0, 0, 1, 1], [], []>} : vector<16x1024xbf16>, vector<1024x256xbf16>, vector<16x256xf32> -> vector<16x256xf32>
    %40 = vector.broadcast %1 : vector<1x256xf32> to vector<16x256xf32>
    %41 = arith.addf %39, %40 : vector<16x256xf32>
    %cst_33 = arith.constant 0.000000e+00 : f32
    %42 = vector.broadcast %cst_33 : f32 to vector<16x256xf32>
    %43 = arith.maximumf %41, %42 : vector<16x256xf32>
    %44 = vector.extract_strided_slice %43 {offsets = [0, 0], sizes = [16, 128], strides = [1, 1]} : vector<16x256xf32> to vector<16x128xf32>
    %45 = vector.extract_strided_slice %43 {offsets = [0, 128], sizes = [16, 128], strides = [1, 1]} : vector<16x256xf32> to vector<16x128xf32>
    %46 = arith.truncf %44 : vector<16x128xf32> to vector<16x128xbf16>
    %c0_34 = arith.constant 0 : index
    %c0_35 = arith.constant 0 : index
    %47 = vector.load %arg5[%c0_34, %c0_35] : memref<128x128xbf16, #tpu.memory_space<vmem>>, vector<128x128xbf16>
    %cst_36 = arith.constant dense<0.000000e+00> : vector<16x128xf32>
    %48 = tpu.matmul %46, %47, %cst_36 {dimension_numbers = #tpu.dot_dimension_numbers<[1], [0], [0], [1], [0, 0, 1, 1], [], []>} : vector<16x128xbf16>, vector<128x128xbf16>, vector<16x128xf32> -> vector<16x128xf32>
    %c0_37 = arith.constant 0 : index
    %c0_38 = arith.constant 0 : index
    %49 = vector.load %arg6[%c0_37, %c0_38] : memref<1x128xf32, #tpu.memory_space<vmem>>, vector<1x128xf32>
    %50 = vector.broadcast %49 : vector<1x128xf32> to vector<16x128xf32>
    %51 = arith.addf %48, %50 : vector<16x128xf32>
    %52 = arith.truncf %51 : vector<16x128xf32> to vector<16x128xbf16>
    %c0_39 = arith.constant 0 : index
    %c0_40 = arith.constant 0 : index
    %53 = vector.load %arg7[%c0_39, %c0_40] : memref<128x128xbf16, #tpu.memory_space<vmem>>, vector<128x128xbf16>
    %cst_41 = arith.constant dense<0.000000e+00> : vector<16x128xf32>
    %54 = tpu.matmul %52, %53, %cst_41 {dimension_numbers = #tpu.dot_dimension_numbers<[1], [0], [0], [1], [0, 0, 1, 1], [], []>} : vector<16x128xbf16>, vector<128x128xbf16>, vector<16x128xf32> -> vector<16x128xf32>
    %c0_42 = arith.constant 0 : index
    %c0_43 = arith.constant 0 : index
    %55 = vector.load %arg8[%c0_42, %c0_43] : memref<1x128xf32, #tpu.memory_space<vmem>>, vector<1x128xf32>
    %56 = vector.broadcast %55 : vector<1x128xf32> to vector<16x128xf32>
    %57 = arith.addf %54, %56 : vector<16x128xf32>
    %cst_44 = arith.constant 0.000000e+00 : f32
    %58 = vector.broadcast %cst_44 : f32 to vector<16x128xf32>
    %59 = arith.maximumf %57, %58 : vector<16x128xf32>
    %60 = arith.truncf %59 : vector<16x128xf32> to vector<16x128xbf16>
    %c0_45 = arith.constant 0 : index
    %c0_46 = arith.constant 0 : index
    %61 = vector.load %arg9[%c0_45, %c0_46] : memref<128x128xbf16, #tpu.memory_space<vmem>>, vector<128x128xbf16>
    %cst_47 = arith.constant dense<0.000000e+00> : vector<16x128xf32>
    %62 = tpu.matmul %60, %61, %cst_47 {dimension_numbers = #tpu.dot_dimension_numbers<[1], [0], [0], [1], [0, 0, 1, 1], [], []>} : vector<16x128xbf16>, vector<128x128xbf16>, vector<16x128xf32> -> vector<16x128xf32>
    %c0_48 = arith.constant 0 : index
    %c0_49 = arith.constant 0 : index
    %63 = vector.load %arg10[%c0_48, %c0_49] : memref<1x128xf32, #tpu.memory_space<vmem>>, vector<1x128xf32>
    %64 = vector.broadcast %63 : vector<1x128xf32> to vector<16x128xf32>
    %65 = arith.addf %62, %64 : vector<16x128xf32>
    %66 = arith.truncf %45 : vector<16x128xf32> to vector<16x128xbf16>
    %c0_50 = arith.constant 0 : index
    %c0_51 = arith.constant 0 : index
    %67 = vector.load %arg11[%c0_50, %c0_51] : memref<128x128xbf16, #tpu.memory_space<vmem>>, vector<128x128xbf16>
    %cst_52 = arith.constant dense<0.000000e+00> : vector<16x128xf32>
    %68 = tpu.matmul %66, %67, %cst_52 {dimension_numbers = #tpu.dot_dimension_numbers<[1], [0], [0], [1], [0, 0, 1, 1], [], []>} : vector<16x128xbf16>, vector<128x128xbf16>, vector<16x128xf32> -> vector<16x128xf32>
    %c0_53 = arith.constant 0 : index
    %c0_54 = arith.constant 0 : index
    %69 = vector.load %arg12[%c0_53, %c0_54] : memref<1x128xf32, #tpu.memory_space<vmem>>, vector<1x128xf32>
    %70 = vector.broadcast %69 : vector<1x128xf32> to vector<16x128xf32>
    %71 = arith.addf %68, %70 : vector<16x128xf32>
    %c0_55 = arith.constant 0 : index
    %c256 = arith.constant 256 : index
    %72 = vector.load %arg13[%c0_55, %c256] : memref<16x512xf32, #tpu.memory_space<vmem>>, vector<16x128xf32>
    tpu.vector_store %arg13[%c0_55, %c256], %65 {strides = array<i32>} : memref<16x512xf32, #tpu.memory_space<vmem>>, vector<16x128xf32>,
    %c0_56 = arith.constant 0 : index
    %c384 = arith.constant 384 : index
    %73 = vector.load %arg13[%c0_56, %c384] : memref<16x512xf32, #tpu.memory_space<vmem>>, vector<16x128xf32>
    tpu.vector_store %arg13[%c0_56, %c384], %71 {strides = array<i32>} : memref<16x512xf32, #tpu.memory_space<vmem>>, vector<16x128xf32>,
    return
  }
  func.func @transform_0(%arg0: i32) -> (i32, i32) {
    %c0_i32 = arith.constant 0 : i32
    %c0_i32_0 = arith.constant 0 : i32
    return %arg0, %c0_i32 : i32, i32
  }
  func.func @transform_1(%arg0: i32) -> (i32, i32) {
    %c0_i32 = arith.constant 0 : i32
    %c0_i32_0 = arith.constant 0 : i32
    return %arg0, %c0_i32 : i32, i32
  }
  func.func @transform_2(%arg0: i32) -> (i32, i32) {
    %c0_i32 = arith.constant 0 : i32
    %c0_i32_0 = arith.constant 0 : i32
    %c0_i32_1 = arith.constant 0 : i32
    return %c0_i32, %c0_i32_0 : i32, i32
  }
  func.func @transform_3(%arg0: i32) -> (i32, i32) {
    %c0_i32 = arith.constant 0 : i32
    %c0_i32_0 = arith.constant 0 : i32
    %c0_i32_1 = arith.constant 0 : i32
    return %c0_i32, %c0_i32_0 : i32, i32
  }
  func.func @transform_4(%arg0: i32) -> (i32, i32) {
    %c0_i32 = arith.constant 0 : i32
    %c0_i32_0 = arith.constant 0 : i32
    %c0_i32_1 = arith.constant 0 : i32
    return %c0_i32, %c0_i32_0 : i32, i32
  }
  func.func @transform_5(%arg0: i32) -> (i32, i32) {
    %c0_i32 = arith.constant 0 : i32
    %c0_i32_0 = arith.constant 0 : i32
    %c0_i32_1 = arith.constant 0 : i32
    return %c0_i32, %c0_i32_0 : i32, i32
  }
  func.func @transform_6(%arg0: i32) -> (i32, i32) {
    %c0_i32 = arith.constant 0 : i32
    %c0_i32_0 = arith.constant 0 : i32
    %c0_i32_1 = arith.constant 0 : i32
    return %c0_i32, %c0_i32_0 : i32, i32
  }
  func.func @transform_7(%arg0: i32) -> (i32, i32) {
    %c0_i32 = arith.constant 0 : i32
    %c0_i32_0 = arith.constant 0 : i32
    %c0_i32_1 = arith.constant 0 : i32
    return %c0_i32, %c0_i32_0 : i32, i32
  }
  func.func @transform_8(%arg0: i32) -> (i32, i32) {
    %c0_i32 = arith.constant 0 : i32
    %c0_i32_0 = arith.constant 0 : i32
    %c0_i32_1 = arith.constant 0 : i32
    return %c0_i32, %c0_i32_0 : i32, i32
  }
  func.func @transform_9(%arg0: i32) -> (i32, i32) {
    %c0_i32 = arith.constant 0 : i32
    %c0_i32_0 = arith.constant 0 : i32
    %c0_i32_1 = arith.constant 0 : i32
    return %c0_i32, %c0_i32_0 : i32, i32
  }
  func.func @transform_10(%arg0: i32) -> (i32, i32) {
    %c0_i32 = arith.constant 0 : i32
    %c0_i32_0 = arith.constant 0 : i32
    %c0_i32_1 = arith.constant 0 : i32
    return %c0_i32, %c0_i32_0 : i32, i32
  }
  func.func @transform_11(%arg0: i32) -> (i32, i32) {
    %c0_i32 = arith.constant 0 : i32
    %c0_i32_0 = arith.constant 0 : i32
    %c0_i32_1 = arith.constant 0 : i32
    return %c0_i32, %c0_i32_0 : i32, i32
  }
  func.func @transform_12(%arg0: i32) -> (i32, i32) {
    %c0_i32 = arith.constant 0 : i32
    %c0_i32_0 = arith.constant 0 : i32
    return %arg0, %c0_i32 : i32, i32
  }
}

</mosaic_0001>

<llo_original>
// kernel: tpu_custom_call.1
$region0: #{tpu_custom_call.1}
  #allocation0 [shape = 'u32[]', space=smem, size = 0x4, offset = 0x4, fixed_abs, tag = 'smem constant byte address 0x4 - core index']
  #allocation1 [shape = 'u32[144,128]{1,0:T(1,128)}', space=vmem, size = 0x12000, scoped, tag = 'internal scratch']
  %s0 = inlined_call_operand.hbm [shape: bf16[16,1024], index: 0, kind: input, shape index: {}]
  %s1 = inlined_call_operand.hbm [shape: bf16[16,1024], index: 1, kind: input, shape index: {}]
  %s2 = inlined_call_operand.hbm [shape: bf16[1024,256], index: 2, kind: input, shape index: {}]
  %s3 = inlined_call_operand.vmem [shape: f32[1,256], index: 3, kind: input, shape index: {}]
  %s4 = inlined_call_operand.hbm [shape: bf16[128,128], index: 4, kind: input, shape index: {}]
  %s5 = inlined_call_operand.vmem [shape: f32[1,128], index: 5, kind: input, shape index: {}]
  %s6 = inlined_call_operand.hbm [shape: bf16[128,128], index: 6, kind: input, shape index: {}]
  %s7 = inlined_call_operand.vmem [shape: f32[1,128], index: 7, kind: input, shape index: {}]
  %s8 = inlined_call_operand.hbm [shape: bf16[128,128], index: 8, kind: input, shape index: {}]
  %s9 = inlined_call_operand.vmem [shape: f32[1,128], index: 9, kind: input, shape index: {}]
  %s10 = inlined_call_operand.hbm [shape: bf16[128,128], index: 10, kind: input, shape index: {}]
  %s11 = inlined_call_operand.vmem [shape: f32[1,128], index: 11, kind: input, shape index: {}]
  %s12 = inlined_call_operand.hbm [shape: f32[16,512], index: 12, kind: output, shape index: {}]
  %s13 = sld [smem:[#allocation0]]
  $region86: #{tpu_custom_call.1} parent=0
    _
  %s15 = ssub.s32 1, %s13
  %s16 = scalar_select 0, %s15, %s13
  $region1: #{tpu_custom_call.1} parent=0
    #allocation2 [shape = 'u8[32768]{0}', space=vmem, size = 0x8000, scoped, tag = 'input window, operand 0, single buffered']
    #allocation3 [shape = 's32[1]{0}', space=sflag, size = 0x4, scoped, tag = 'scoped memory for tpu_custom_call.1']
    #allocation4 [shape = 's32[1]{0}', space=sflag, size = 0x4, scoped, tag = 'scoped memory for tpu_custom_call.1']
    #allocation5 [shape = 'u8[32768]{0}', space=vmem, size = 0x8000, scoped, tag = 'input window, operand 1, single buffered']
    #allocation6 [shape = 's32[1]{0}', space=sflag, size = 0x4, scoped, tag = 'scoped memory for tpu_custom_call.1']
    #allocation7 [shape = 'u8[524288]{0}', space=vmem, size = 0x80000, scoped, tag = 'input window, operand 2, single buffered']
    #allocation8 [shape = 'u8[32768]{0}', space=vmem, size = 0x8000, scoped, tag = 'input window, operand 4, single buffered']
    #allocation9 [shape = 's32[1]{0}', space=sflag, size = 0x4, scoped, tag = 'scoped memory for tpu_custom_call.1']
    #allocation10 [shape = 'u8[32768]{0}', space=vmem, size = 0x8000, scoped, tag = 'input window, operand 6, single buffered']
    #allocation11 [shape = 'u8[32768]{0}', space=vmem, size = 0x8000, scoped, tag = 'input window, operand 8, single buffered']
    #allocation12 [shape = 's32[1]{0}', space=sflag, size = 0x4, scoped, tag = 'scoped memory for tpu_custom_call.1']
    #allocation13 [shape = 'u8[32768]{0}', space=vmem, size = 0x8000, scoped, tag = 'input window, operand 10, single buffered']
    #allocation14 [shape = 'u8[32768]{0}', space=vmem, size = 0x8000, scoped, tag = 'output window, operand 0, single buffered']
    %17 = vsyncpa [#allocation3], 0
    %18 = vsyncpa [#allocation6], 0
    %19 = vsyncpa [#allocation9], 0
    %20 = vsyncpa [#allocation12], 0
    %21 = vsyncpa [#allocation4], 0
    // Predicated region
    $region2: #{tpu_custom_call.1} parent=1 // pred_check
      _
    $region3: #{tpu_custom_call.1} parent=1 // pred_check_branch
      %23 = sbr.rel (0) target = $region5
    $region4: #{tpu_custom_call.1} parent=1 // pred_region
      %s25 = ssub.s32 1024, 1024
      %26 = vsyncadd [#allocation3], %s25
      %s27 = sshll.u32 [#allocation2], 4
      %s28 = int_to_ptr.vmem [resolvable:$true] %s27
      %33 = dma.hbm_to_vmem [thread:$0]  %s0, 1024, %s28, [#allocation3], 512, 512, 32
    $region5: #{tpu_custom_call.1} parent=1 // pred_fallthru
      _
    // Predicated region
    $region6: #{tpu_custom_call.1} parent=1 // pred_check
      _
    $region7: #{tpu_custom_call.1} parent=1 // pred_check_branch
      %35 = sbr.rel (0) target = $region9
    $region8: #{tpu_custom_call.1} parent=1 // pred_region
      %s37 = ssub.s32 1024, 1024
      %38 = vsyncadd [#allocation6], %s37
      %s39 = sshll.u32 [#allocation5], 4
      %s40 = int_to_ptr.vmem [resolvable:$true] %s39
      %45 = dma.hbm_to_vmem [thread:$0]  %s1, 1024, %s40, [#allocation6], 512, 512, 32
    $region9: #{tpu_custom_call.1} parent=1 // pred_fallthru
      _
    // Predicated region
    $region10: #{tpu_custom_call.1} parent=1 // pred_check
      _
    $region11: #{tpu_custom_call.1} parent=1 // pred_check_branch
      %47 = sbr.rel (0) target = $region13
    $region12: #{tpu_custom_call.1} parent=1 // pred_region
      %s49 = ssub.s32 16384, 16384
      %50 = vsyncadd [#allocation6], %s49
      %s51 = sshll.u32 [#allocation7], 4
      %s52 = int_to_ptr.vmem [resolvable:$true] %s51
      %57 = dma.hbm_to_vmem [thread:$0]  %s2, 16384, %s52, [#allocation6], 128, 128, 8
    $region13: #{tpu_custom_call.1} parent=1 // pred_fallthru
      _
    // Predicated region
    $region14: #{tpu_custom_call.1} parent=1 // pred_check
      _
    $region15: #{tpu_custom_call.1} parent=1 // pred_check_branch
      %59 = sbr.rel (0) target = $region17
    $region16: #{tpu_custom_call.1} parent=1 // pred_region
      _
    $region17: #{tpu_custom_call.1} parent=1 // pred_fallthru
      _
    // Predicated region
    $region18: #{tpu_custom_call.1} parent=1 // pred_check
      _
    $region19: #{tpu_custom_call.1} parent=1 // pred_check_branch
      %61 = sbr.rel (0) target = $region21
    $region20: #{tpu_custom_call.1} parent=1 // pred_region
      %s63 = ssub.s32 1024, 1024
      %64 = vsyncadd [#allocation9], %s63
      %s65 = sshll.u32 [#allocation8], 4
      %s66 = int_to_ptr.vmem [resolvable:$true] %s65
      %71 = dma.hbm_to_vmem [thread:$0]  %s4, 1024, %s66, [#allocation9], 64, 64, 4
    $region21: #{tpu_custom_call.1} parent=1 // pred_fallthru
      _
    // Predicated region
    $region22: #{tpu_custom_call.1} parent=1 // pred_check
      _
    $region23: #{tpu_custom_call.1} parent=1 // pred_check_branch
      %73 = sbr.rel (0) target = $region25
    $region24: #{tpu_custom_call.1} parent=1 // pred_region
      _
    $region25: #{tpu_custom_call.1} parent=1 // pred_fallthru
      _
    // Predicated region
    $region26: #{tpu_custom_call.1} parent=1 // pred_check
      _
    $region27: #{tpu_custom_call.1} parent=1 // pred_check_branch
      %75 = sbr.rel (0) target = $region29
    $region28: #{tpu_custom_call.1} parent=1 // pred_region
      %s77 = ssub.s32 1024, 1024
      %78 = vsyncadd [#allocation9], %s77
      %s79 = sshll.u32 [#allocation10], 4
      %s80 = int_to_ptr.vmem [resolvable:$true] %s79
      %85 = dma.hbm_to_vmem [thread:$0]  %s6, 1024, %s80, [#allocation9], 64, 64, 4
    $region29: #{tpu_custom_call.1} parent=1 // pred_fallthru
      _
    // Predicated region
    $region30: #{tpu_custom_call.1} parent=1 // pred_check
      _
    $region31: #{tpu_custom_call.1} parent=1 // pred_check_branch
      %87 = sbr.rel (0) target = $region33
    $region32: #{tpu_custom_call.1} parent=1 // pred_region
      _
    $region33: #{tpu_custom_call.1} parent=1 // pred_fallthru
      _
    // Predicated region
    $region34: #{tpu_custom_call.1} parent=1 // pred_check
      _
    $region35: #{tpu_custom_call.1} parent=1 // pred_check_branch
      %89 = sbr.rel (0) target = $region37
    $region36: #{tpu_custom_call.1} parent=1 // pred_region
      %s91 = ssub.s32 1024, 1024
      %92 = vsyncadd [#allocation12], %s91
      %s93 = sshll.u32 [#allocation11], 4
      %s94 = int_to_ptr.vmem [resolvable:$true] %s93
      %99 = dma.hbm_to_vmem [thread:$0]  %s8, 1024, %s94, [#allocation12], 64, 64, 4
    $region37: #{tpu_custom_call.1} parent=1 // pred_fallthru
      _
    // Predicated region
    $region38: #{tpu_custom_call.1} parent=1 // pred_check
      _
    $region39: #{tpu_custom_call.1} parent=1 // pred_check_branch
      %101 = sbr.rel (0) target = $region41
    $region40: #{tpu_custom_call.1} parent=1 // pred_region
      _
    $region41: #{tpu_custom_call.1} parent=1 // pred_fallthru
      _
    // Predicated region
    $region42: #{tpu_custom_call.1} parent=1 // pred_check
      _
    $region43: #{tpu_custom_call.1} parent=1 // pred_check_branch
      %103 = sbr.rel (0) target = $region45
    $region44: #{tpu_custom_call.1} parent=1 // pred_region
      %s105 = ssub.s32 1024, 1024
      %106 = vsyncadd [#allocation12], %s105
      %s107 = sshll.u32 [#allocation13], 4
      %s108 = int_to_ptr.vmem [resolvable:$true] %s107
      %113 = dma.hbm_to_vmem [thread:$0]  %s10, 1024, %s108, [#allocation12], 64, 64, 4
    $region45: #{tpu_custom_call.1} parent=1 // pred_fallthru
      _
    // Predicated region
    $region46: #{tpu_custom_call.1} parent=1 // pred_check
      _
    $region47: #{tpu_custom_call.1} parent=1 // pred_check_branch
      %115 = sbr.rel (0) target = $region49
    $region48: #{tpu_custom_call.1} parent=1 // pred_region
      _
    $region49: #{tpu_custom_call.1} parent=1 // pred_fallthru
      _
    // Predicated region
    $region50: #{tpu_custom_call.1} parent=1 // pred_check
      _
    $region51: #{tpu_custom_call.1} parent=1 // pred_check_branch
      %117 = sbr.rel (0) target = $region53
    $region52: #{tpu_custom_call.1} parent=1 // pred_region
      %118 = dma.done [#allocation3], 1024
    $region53: #{tpu_custom_call.1} parent=1 // pred_fallthru
      _
    // Predicated region
    $region54: #{tpu_custom_call.1} parent=1 // pred_check
      _
    $region55: #{tpu_custom_call.1} parent=1 // pred_check_branch
      %120 = sbr.rel (0) target = $region57
    $region56: #{tpu_custom_call.1} parent=1 // pred_region
      %121 = dma.done [#allocation6], 1024
    $region57: #{tpu_custom_call.1} parent=1 // pred_fallthru
      _
    // Predicated region
    $region58: #{tpu_custom_call.1} parent=1 // pred_check
      _
    $region59: #{tpu_custom_call.1} parent=1 // pred_check_branch
      %123 = sbr.rel (0) target = $region61
    $region60: #{tpu_custom_call.1} parent=1 // pred_region
      %124 = dma.done [#allocation6], 16384
    $region61: #{tpu_custom_call.1} parent=1 // pred_fallthru
      _
    // Predicated region
    $region62: #{tpu_custom_call.1} parent=1 // pred_check
      _
    $region63: #{tpu_custom_call.1} parent=1 // pred_check_branch
      %126 = sbr.rel (0) target = $region65
    $region64: #{tpu_custom_call.1} parent=1 // pred_region
      %127 = dma.done [#allocation9], 1024
    $region65: #{tpu_custom_call.1} parent=1 // pred_fallthru
      _
    // Predicated region
    $region66: #{tpu_custom_call.1} parent=1 // pred_check
      _
    $region67: #{tpu_custom_call.1} parent=1 // pred_check_branch
      %129 = sbr.rel (0) target = $region69
    $region68: #{tpu_custom_call.1} parent=1 // pred_region
      %130 = dma.done [#allocation9], 1024
    $region69: #{tpu_custom_call.1} parent=1 // pred_fallthru
      _
    // Predicated region
    $region70: #{tpu_custom_call.1} parent=1 // pred_check
      _
    $region71: #{tpu_custom_call.1} parent=1 // pred_check_branch
      %132 = sbr.rel (0) target = $region73
    $region72: #{tpu_custom_call.1} parent=1 // pred_region
      %133 = dma.done [#allocation12], 1024
    $region73: #{tpu_custom_call.1} parent=1 // pred_fallthru
      _
    // Predicated region
    $region74: #{tpu_custom_call.1} parent=1 // pred_check
      _
    $region75: #{tpu_custom_call.1} parent=1 // pred_check_branch
      %135 = sbr.rel (0) target = $region77
    $region76: #{tpu_custom_call.1} parent=1 // pred_region
      %136 = dma.done [#allocation12], 1024
    $region77: #{tpu_custom_call.1} parent=1 // pred_fallthru
      _
    %v138 = vld [vmem:[#allocation7] sm:$0xff]
    %v139 = vld [vmem:[#allocation7 + $0x8] sm:$0xff]
    %v140 = vld [vmem:[#allocation7 + $0x10] sm:$0xff]
    %v141 = vld [vmem:[#allocation7 + $0x18] sm:$0xff]
    %v142 = vld [vmem:[#allocation7 + $0x20] sm:$0xff]
    %v143 = vld [vmem:[#allocation7 + $0x28] sm:$0xff]
    %v144 = vld [vmem:[#allocation7 + $0x30] sm:$0xff]
    %v145 = vld [vmem:[#allocation7 + $0x38] sm:$0xff]
    %v146 = vld [vmem:[#allocation7 + $0x40] sm:$0xff]
    %v147 = vld [vmem:[#allocation7 + $0x48] sm:$0xff]
    %v148 = vld [vmem:[#allocation7 + $0x50] sm:$0xff]
    %v149 = vld [vmem:[#allocation7 + $0x58] sm:$0xff]
    %v150 = vld [vmem:[#allocation7 + $0x60] sm:$0xff]
    %v151 = vld [vmem:[#allocation7 + $0x68] sm:$0xff]
    %v152 = vld [vmem:[#allocation7 + $0x70] sm:$0xff]
    %v153 = vld [vmem:[#allocation7 + $0x78] sm:$0xff]
    %v154 = vld [vmem:[#allocation7 + $0x80] sm:$0xff]
    %v155 = vld [vmem:[#allocation7 + $0x88] sm:$0xff]
    %v156 = vld [vmem:[#allocation7 + $0x90] sm:$0xff]
    %v157 = vld [vmem:[#allocation7 + $0x98] sm:$0xff]
    %v158 = vld [vmem:[#allocation7 + $0xa0] sm:$0xff]
    %v159 = vld [vmem:[#allocation7 + $0xa8] sm:$0xff]
    %v160 = vld [vmem:[#allocation7 + $0xb0] sm:$0xff]
    %v161 = vld [vmem:[#allocation7 + $0xb8] sm:$0xff]
    %v162 = vld [vmem:[#allocation7 + $0xc0] sm:$0xff]
    %v163 = vld [vmem:[#allocation7 + $0xc8] sm:$0xff]
    %v164 = vld [vmem:[#allocation7 + $0xd0] sm:$0xff]
    %v165 = vld [vmem:[#allocation7 + $0xd8] sm:$0xff]
    %v166 = vld [vmem:[#allocation7 + $0xe0] sm:$0xff]
    %v167 = vld [vmem:[#allocation7 + $0xe8] sm:$0xff]
    %v168 = vld [vmem:[#allocation7 + $0xf0] sm:$0xff]
    %v169 = vld [vmem:[#allocation7 + $0xf8] sm:$0xff]
    %v170 = vld [vmem:[#allocation7 + $0x100] sm:$0xff]
    %v171 = vld [vmem:[#allocation7 + $0x108] sm:$0xff]
    %v172 = vld [vmem:[#allocation7 + $0x110] sm:$0xff]
    %v173 = vld [vmem:[#allocation7 + $0x118] sm:$0xff]
    %v174 = vld [vmem:[#allocation7 + $0x120] sm:$0xff]
    %v175 = vld [vmem:[#allocation7 + $0x128] sm:$0xff]
    %v176 = vld [vmem:[#allocation7 + $0x130] sm:$0xff]
    %v177 = vld [vmem:[#allocation7 + $0x138] sm:$0xff]
    %v178 = vld [vmem:[#allocation7 + $0x140] sm:$0xff]
    %v179 = vld [vmem:[#allocation7 + $0x148] sm:$0xff]
    %v180 = vld [vmem:[#allocation7 + $0x150] sm:$0xff]
    %v181 = vld [vmem:[#allocation7 + $0x158] sm:$0xff]
    %v182 = vld [vmem:[#allocation7 + $0x160] sm:$0xff]
    %v183 = vld [vmem:[#allocation7 + $0x168] sm:$0xff]
    %v184 = vld [vmem:[#allocation7 + $0x170] sm:$0xff]
    %v185 = vld [vmem:[#allocation7 + $0x178] sm:$0xff]
    %v186 = vld [vmem:[#allocation7 + $0x180] sm:$0xff]
    %v187 = vld [vmem:[#allocation7 + $0x188] sm:$0xff]
    %v188 = vld [vmem:[#allocation7 + $0x190] sm:$0xff]
    %v189 = vld [vmem:[#allocation7 + $0x198] sm:$0xff]
    %v190 = vld [vmem:[#allocation7 + $0x1a0] sm:$0xff]
    %v191 = vld [vmem:[#allocation7 + $0x1a8] sm:$0xff]
    %v192 = vld [vmem:[#allocation7 + $0x1b0] sm:$0xff]
    %v193 = vld [vmem:[#allocation7 + $0x1b8] sm:$0xff]
    %v194 = vld [vmem:[#allocation7 + $0x1c0] sm:$0xff]
    %v195 = vld [vmem:[#allocation7 + $0x1c8] sm:$0xff]
    %v196 = vld [vmem:[#allocation7 + $0x1d0] sm:$0xff]
    %v197 = vld [vmem:[#allocation7 + $0x1d8] sm:$0xff]
    %v198 = vld [vmem:[#allocation7 + $0x1e0] sm:$0xff]
    %v199 = vld [vmem:[#allocation7 + $0x1e8] sm:$0xff]
    %v200 = vld [vmem:[#allocation7 + $0x1f0] sm:$0xff]
    %v201 = vld [vmem:[#allocation7 + $0x1f8] sm:$0xff]
    %v202 = vld [vmem:[#allocation7 + $0x200] sm:$0xff]
    %v203 = vld [vmem:[#allocation7 + $0x208] sm:$0xff]
    %v204 = vld [vmem:[#allocation7 + $0x210] sm:$0xff]
    %v205 = vld [vmem:[#allocation7 + $0x218] sm:$0xff]
    %v206 = vld [vmem:[#allocation7 + $0x220] sm:$0xff]
    %v207 = vld [vmem:[#allocation7 + $0x228] sm:$0xff]
    %v208 = vld [vmem:[#allocation7 + $0x230] sm:$0xff]
    %v209 = vld [vmem:[#allocation7 + $0x238] sm:$0xff]
    %v210 = vld [vmem:[#allocation7 + $0x240] sm:$0xff]
    %v211 = vld [vmem:[#allocation7 + $0x248] sm:$0xff]
    %v212 = vld [vmem:[#allocation7 + $0x250] sm:$0xff]
    %v213 = vld [vmem:[#allocation7 + $0x258] sm:$0xff]
    %v214 = vld [vmem:[#allocation7 + $0x260] sm:$0xff]
    %v215 = vld [vmem:[#allocation7 + $0x268] sm:$0xff]
    %v216 = vld [vmem:[#allocation7 + $0x270] sm:$0xff]
    %v217 = vld [vmem:[#allocation7 + $0x278] sm:$0xff]
    %v218 = vld [vmem:[#allocation7 + $0x280] sm:$0xff]
    %v219 = vld [vmem:[#allocation7 + $0x288] sm:$0xff]
    %v220 = vld [vmem:[#allocation7 + $0x290] sm:$0xff]
    %v221 = vld [vmem:[#allocation7 + $0x298] sm:$0xff]
    %v222 = vld [vmem:[#allocation7 + $0x2a0] sm:$0xff]
    %v223 = vld [vmem:[#allocation7 + $0x2a8] sm:$0xff]
    %v224 = vld [vmem:[#allocation7 + $0x2b0] sm:$0xff]
    %v225 = vld [vmem:[#allocation7 + $0x2b8] sm:$0xff]
    %v226 = vld [vmem:[#allocation7 + $0x2c0] sm:$0xff]
    %v227 = vld [vmem:[#allocation7 + $0x2c8] sm:$0xff]
    %v228 = vld [vmem:[#allocation7 + $0x2d0] sm:$0xff]
    %v229 = vld [vmem:[#allocation7 + $0x2d8] sm:$0xff]
    %v230 = vld [vmem:[#allocation7 + $0x2e0] sm:$0xff]
    %v231 = vld [vmem:[#allocation7 + $0x2e8] sm:$0xff]
    %v232 = vld [vmem:[#allocation7 + $0x2f0] sm:$0xff]
    %v233 = vld [vmem:[#allocation7 + $0x2f8] sm:$0xff]
    %v234 = vld [vmem:[#allocation7 + $0x300] sm:$0xff]
    %v235 = vld [vmem:[#allocation7 + $0x308] sm:$0xff]
    %v236 = vld [vmem:[#allocation7 + $0x310] sm:$0xff]
    %v237 = vld [vmem:[#allocation7 + $0x318] sm:$0xff]
    %v238 = vld [vmem:[#allocation7 + $0x320] sm:$0xff]
    %v239 = vld [vmem:[#allocation7 + $0x328] sm:$0xff]
    %v240 = vld [vmem:[#allocation7 + $0x330] sm:$0xff]
    %v241 = vld [vmem:[#allocation7 + $0x338] sm:$0xff]
    %v242 = vld [vmem:[#allocation7 + $0x340] sm:$0xff]
    %v243 = vld [vmem:[#allocation7 + $0x348] sm:$0xff]
    %v244 = vld [vmem:[#allocation7 + $0x350] sm:$0xff]
    %v245 = vld [vmem:[#allocation7 + $0x358] sm:$0xff]
    %v246 = vld [vmem:[#allocation7 + $0x360] sm:$0xff]
    %v247 = vld [vmem:[#allocation7 + $0x368] sm:$0xff]
    %v248 = vld [vmem:[#allocation7 + $0x370] sm:$0xff]
    %v249 = vld [vmem:[#allocation7 + $0x378] sm:$0xff]
    %v250 = vld [vmem:[#allocation7 + $0x380] sm:$0xff]
    %v251 = vld [vmem:[#allocation7 + $0x388] sm:$0xff]
    %v252 = vld [vmem:[#allocation7 + $0x390] sm:$0xff]
    %v253 = vld [vmem:[#allocation7 + $0x398] sm:$0xff]
    %v254 = vld [vmem:[#allocation7 + $0x3a0] sm:$0xff]
    %v255 = vld [vmem:[#allocation7 + $0x3a8] sm:$0xff]
    %v256 = vld [vmem:[#allocation7 + $0x3b0] sm:$0xff]
    %v257 = vld [vmem:[#allocation7 + $0x3b8] sm:$0xff]
    %v258 = vld [vmem:[#allocation7 + $0x3c0] sm:$0xff]
    %v259 = vld [vmem:[#allocation7 + $0x3c8] sm:$0xff]
    %v260 = vld [vmem:[#allocation7 + $0x3d0] sm:$0xff]
    %v261 = vld [vmem:[#allocation7 + $0x3d8] sm:$0xff]
    %v262 = vld [vmem:[#allocation7 + $0x3e0] sm:$0xff]
    %v263 = vld [vmem:[#allocation7 + $0x3e8] sm:$0xff]
    %v264 = vld [vmem:[#allocation7 + $0x3f0] sm:$0xff]
    %v265 = vld [vmem:[#allocation7 + $0x3f8] sm:$0xff]
    %v266 = vld [vmem:[%s3] sm:$0x3]
    %v267 = vld [vmem:[#allocation2] sm:$0xff]
    %v268 = vld [vmem:[#allocation2 + $0x8] sm:$0xff]
    %v269 = vld [vmem:[#allocation2 + $0x10] sm:$0xff]
    %v270 = vld [vmem:[#allocation2 + $0x18] sm:$0xff]
    %v271 = vld [vmem:[#allocation2 + $0x20] sm:$0xff]
    %v272 = vld [vmem:[#allocation2 + $0x28] sm:$0xff]
    %v273 = vld [vmem:[#allocation2 + $0x30] sm:$0xff]
    %v274 = vld [vmem:[#allocation2 + $0x38] sm:$0xff]
    %v276 = vlaneseq
    %v277 = vshrl.u32 %v276, 7
    %v278 = vsub.s32 0, %v277
    %v279 = vrot.slane %v266, %v278
    %v280 = vlaneseq
    %v281 = vshrl.u32 %v280, 7
    %v282 = vsub.s32 1, %v281
    %v283 = vrot.slane %v266, %v282
    %v294 = vunpack.c.l.b16 %v267
    %v295 = vunpack.c.h.b16 %v267
    %v296 = vunpack.c.l.b16 %v268
    %v297 = vunpack.c.h.b16 %v268
    %v298 = vunpack.c.l.b16 %v269
    %v299 = vunpack.c.h.b16 %v269
    %v300 = vunpack.c.l.b16 %v270
    %v301 = vunpack.c.h.b16 %v270
    %v302 = vunpack.c.l.b16 %v271
    %v303 = vunpack.c.h.b16 %v271
    %v304 = vunpack.c.l.b16 %v272
    %v305 = vunpack.c.h.b16 %v272
    %v306 = vunpack.c.l.b16 %v273
    %v307 = vunpack.c.h.b16 %v273
    %v308 = vunpack.c.l.b16 %v274
    %v309 = vunpack.c.h.b16 %v274
    %v310 = vpack.c.b16 %v302, %v294
    %v311 = vpack.c.b16 %v303, %v295
    %v312 = vpack.c.b16 %v304, %v296
    %v313 = vpack.c.b16 %v305, %v297
    %v314 = vpack.c.b16 %v306, %v298
    %v315 = vpack.c.b16 %v307, %v299
    %v316 = vpack.c.b16 %v308, %v300
    %v317 = vpack.c.b16 %v309, %v301
    %v454 = vunpack.c.l.b16 %v138
    %v455 = vunpack.c.h.b16 %v138
    %v456 = vunpack.c.l.b16 %v139
    %v457 = vunpack.c.h.b16 %v139
    %v458 = vunpack.c.l.b16 %v140
    %v459 = vunpack.c.h.b16 %v140
    %v460 = vunpack.c.l.b16 %v141
    %v461 = vunpack.c.h.b16 %v141
    %v462 = vunpack.c.l.b16 %v142
    %v463 = vunpack.c.h.b16 %v142
    %v464 = vunpack.c.l.b16 %v143
    %v465 = vunpack.c.h.b16 %v143
    %v466 = vunpack.c.l.b16 %v144
    %v467 = vunpack.c.h.b16 %v144
    %v468 = vunpack.c.l.b16 %v145
    %v469 = vunpack.c.h.b16 %v145
    %v470 = vunpack.c.l.b16 %v146
    %v471 = vunpack.c.h.b16 %v146
    %v472 = vunpack.c.l.b16 %v147
    %v473 = vunpack.c.h.b16 %v147
    %v474 = vunpack.c.l.b16 %v148
    %v475 = vunpack.c.h.b16 %v148
    %v476 = vunpack.c.l.b16 %v149
    %v477 = vunpack.c.h.b16 %v149
    %v478 = vunpack.c.l.b16 %v150
    %v479 = vunpack.c.h.b16 %v150
    %v480 = vunpack.c.l.b16 %v151
    %v481 = vunpack.c.h.b16 %v151
    %v482 = vunpack.c.l.b16 %v152
    %v483 = vunpack.c.h.b16 %v152
    %v484 = vunpack.c.l.b16 %v153
    %v485 = vunpack.c.h.b16 %v153
    %v486 = vunpack.c.l.b16 %v154
    %v487 = vunpack.c.h.b16 %v154
    %v488 = vunpack.c.l.b16 %v155
    %v489 = vunpack.c.h.b16 %v155
    %v490 = vunpack.c.l.b16 %v156
    %v491 = vunpack.c.h.b16 %v156
    %v492 = vunpack.c.l.b16 %v157
    %v493 = vunpack.c.h.b16 %v157
    %v494 = vunpack.c.l.b16 %v158
    %v495 = vunpack.c.h.b16 %v158
    %v496 = vunpack.c.l.b16 %v159
    %v497 = vunpack.c.h.b16 %v159
    %v498 = vunpack.c.l.b16 %v160
    %v499 = vunpack.c.h.b16 %v160
    %v500 = vunpack.c.l.b16 %v161
    %v501 = vunpack.c.h.b16 %v161
    %v502 = vunpack.c.l.b16 %v162
    %v503 = vunpack.c.h.b16 %v162
    %v504 = vunpack.c.l.b16 %v163
    %v505 = vunpack.c.h.b16 %v163
    %v506 = vunpack.c.l.b16 %v164
    %v507 = vunpack.c.h.b16 %v164
    %v508 = vunpack.c.l.b16 %v165
    %v509 = vunpack.c.h.b16 %v165
    %v510 = vunpack.c.l.b16 %v166
    %v511 = vunpack.c.h.b16 %v166
    %v512 = vunpack.c.l.b16 %v167
    %v513 = vunpack.c.h.b16 %v167
    %v514 = vunpack.c.l.b16 %v168
    %v515 = vunpack.c.h.b16 %v168
    %v516 = vunpack.c.l.b16 %v169
    %v517 = vunpack.c.h.b16 %v169
    %v518 = vunpack.c.l.b16 %v170
    %v519 = vunpack.c.h.b16 %v170
    %v520 = vunpack.c.l.b16 %v171
    %v521 = vunpack.c.h.b16 %v171
    %v522 = vunpack.c.l.b16 %v172
    %v523 = vunpack.c.h.b16 %v172
    %v524 = vunpack.c.l.b16 %v173
    %v525 = vunpack.c.h.b16 %v173
    %v526 = vunpack.c.l.b16 %v174
    %v527 = vunpack.c.h.b16 %v174
    %v528 = vunpack.c.l.b16 %v175
    %v529 = vunpack.c.h.b16 %v175
    %v530 = vunpack.c.l.b16 %v176
    %v531 = vunpack.c.h.b16 %v176
    %v532 = vunpack.c.l.b16 %v177
    %v533 = vunpack.c.h.b16 %v177
    %v534 = vunpack.c.l.b16 %v178
    %v535 = vunpack.c.h.b16 %v178
    %v536 = vunpack.c.l.b16 %v179
    %v537 = vunpack.c.h.b16 %v179
    %v538 = vunpack.c.l.b16 %v180
    %v539 = vunpack.c.h.b16 %v180
    %v540 = vunpack.c.l.b16 %v181
    %v541 = vunpack.c.h.b16 %v181
    %v542 = vunpack.c.l.b16 %v182
    %v543 = vunpack.c.h.b16 %v182
    %v544 = vunpack.c.l.b16 %v183
    %v545 = vunpack.c.h.b16 %v183
    %v546 = vunpack.c.l.b16 %v184
    %v547 = vunpack.c.h.b16 %v184
    %v548 = vunpack.c.l.b16 %v185
    %v549 = vunpack.c.h.b16 %v185
    %v550 = vunpack.c.l.b16 %v186
    %v551 = vunpack.c.h.b16 %v186
    %v552 = vunpack.c.l.b16 %v187
    %v553 = vunpack.c.h.b16 %v187
    %v554 = vunpack.c.l.b16 %v188
    %v555 = vunpack.c.h.b16 %v188
    %v556 = vunpack.c.l.b16 %v189
    %v557 = vunpack.c.h.b16 %v189
    %v558 = vunpack.c.l.b16 %v190
    %v559 = vunpack.c.h.b16 %v190
    %v560 = vunpack.c.l.b16 %v191
    %v561 = vunpack.c.h.b16 %v191
    %v562 = vunpack.c.l.b16 %v192
    %v563 = vunpack.c.h.b16 %v192
    %v564 = vunpack.c.l.b16 %v193
    %v565 = vunpack.c.h.b16 %v193
    %v566 = vunpack.c.l.b16 %v194
    %v567 = vunpack.c.h.b16 %v194
    %v568 = vunpack.c.l.b16 %v195
    %v569 = vunpack.c.h.b16 %v195
    %v570 = vunpack.c.l.b16 %v196
    %v571 = vunpack.c.h.b16 %v196
    %v572 = vunpack.c.l.b16 %v197
    %v573 = vunpack.c.h.b16 %v197
    %v574 = vunpack.c.l.b16 %v198
    %v575 = vunpack.c.h.b16 %v198
    %v576 = vunpack.c.l.b16 %v199
    %v577 = vunpack.c.h.b16 %v199
    %v578 = vunpack.c.l.b16 %v200
    %v579 = vunpack.c.h.b16 %v200
    %v580 = vunpack.c.l.b16 %v201
    %v581 = vunpack.c.h.b16 %v201
    %v582 = vunpack.c.l.b16 %v202
    %v583 = vunpack.c.h.b16 %v202
    %v584 = vunpack.c.l.b16 %v203
    %v585 = vunpack.c.h.b16 %v203
    %v586 = vunpack.c.l.b16 %v204
    %v587 = vunpack.c.h.b16 %v204
    %v588 = vunpack.c.l.b16 %v205
    %v589 = vunpack.c.h.b16 %v205
    %v590 = vunpack.c.l.b16 %v206
    %v591 = vunpack.c.h.b16 %v206
    %v592 = vunpack.c.l.b16 %v207
    %v593 = vunpack.c.h.b16 %v207
    %v594 = vunpack.c.l.b16 %v208
    %v595 = vunpack.c.h.b16 %v208
    %v596 = vunpack.c.l.b16 %v209
    %v597 = vunpack.c.h.b16 %v209
    %v598 = vunpack.c.l.b16 %v210
    %v599 = vunpack.c.h.b16 %v210
    %v600 = vunpack.c.l.b16 %v211
    %v601 = vunpack.c.h.b16 %v211
    %v602 = vunpack.c.l.b16 %v212
    %v603 = vunpack.c.h.b16 %v212
    %v604 = vunpack.c.l.b16 %v213
    %v605 = vunpack.c.h.b16 %v213
    %v606 = vunpack.c.l.b16 %v214
    %v607 = vunpack.c.h.b16 %v214
    %v608 = vunpack.c.l.b16 %v215
    %v609 = vunpack.c.h.b16 %v215
    %v610 = vunpack.c.l.b16 %v216
    %v611 = vunpack.c.h.b16 %v216
    %v612 = vunpack.c.l.b16 %v217
    %v613 = vunpack.c.h.b16 %v217
    %v614 = vunpack.c.l.b16 %v218
    %v615 = vunpack.c.h.b16 %v218
    %v616 = vunpack.c.l.b16 %v219
    %v617 = vunpack.c.h.b16 %v219
    %v618 = vunpack.c.l.b16 %v220
    %v619 = vunpack.c.h.b16 %v220
    %v620 = vunpack.c.l.b16 %v221
    %v621 = vunpack.c.h.b16 %v221
    %v622 = vunpack.c.l.b16 %v222
    %v623 = vunpack.c.h.b16 %v222
    %v624 = vunpack.c.l.b16 %v223
    %v625 = vunpack.c.h.b16 %v223
    %v626 = vunpack.c.l.b16 %v224
    %v627 = vunpack.c.h.b16 %v224
    %v628 = vunpack.c.l.b16 %v225
    %v629 = vunpack.c.h.b16 %v225
    %v630 = vunpack.c.l.b16 %v226
    %v631 = vunpack.c.h.b16 %v226
    %v632 = vunpack.c.l.b16 %v227
    %v633 = vunpack.c.h.b16 %v227
    %v634 = vunpack.c.l.b16 %v228
    %v635 = vunpack.c.h.b16 %v228
    %v636 = vunpack.c.l.b16 %v229
    %v637 = vunpack.c.h.b16 %v229
    %v638 = vunpack.c.l.b16 %v230
    %v639 = vunpack.c.h.b16 %v230
    %v640 = vunpack.c.l.b16 %v231
    %v641 = vunpack.c.h.b16 %v231
    %v642 = vunpack.c.l.b16 %v232
    %v643 = vunpack.c.h.b16 %v232
    %v644 = vunpack.c.l.b16 %v233
    %v645 = vunpack.c.h.b16 %v233
    %v646 = vunpack.c.l.b16 %v234
    %v647 = vunpack.c.h.b16 %v234
    %v648 = vunpack.c.l.b16 %v235
    %v649 = vunpack.c.h.b16 %v235
    %v650 = vunpack.c.l.b16 %v236
    %v651 = vunpack.c.h.b16 %v236
    %v652 = vunpack.c.l.b16 %v237
    %v653 = vunpack.c.h.b16 %v237
    %v654 = vunpack.c.l.b16 %v238
    %v655 = vunpack.c.h.b16 %v238
    %v656 = vunpack.c.l.b16 %v239
    %v657 = vunpack.c.h.b16 %v239
    %v658 = vunpack.c.l.b16 %v240
    %v659 = vunpack.c.h.b16 %v240
    %v660 = vunpack.c.l.b16 %v241
    %v661 = vunpack.c.h.b16 %v241
    %v662 = vunpack.c.l.b16 %v242
    %v663 = vunpack.c.h.b16 %v242
    %v664 = vunpack.c.l.b16 %v243
    %v665 = vunpack.c.h.b16 %v243
    %v666 = vunpack.c.l.b16 %v244
    %v667 = vunpack.c.h.b16 %v244
    %v668 = vunpack.c.l.b16 %v245
    %v669 = vunpack.c.h.b16 %v245
    %v670 = vunpack.c.l.b16 %v246
    %v671 = vunpack.c.h.b16 %v246
    %v672 = vunpack.c.l.b16 %v247
    %v673 = vunpack.c.h.b16 %v247
    %v674 = vunpack.c.l.b16 %v248
    %v675 = vunpack.c.h.b16 %v248
    %v676 = vunpack.c.l.b16 %v249
    %v677 = vunpack.c.h.b16 %v249
    %v678 = vunpack.c.l.b16 %v250
    %v679 = vunpack.c.h.b16 %v250
    %v680 = vunpack.c.l.b16 %v251
    %v681 = vunpack.c.h.b16 %v251
    %v682 = vunpack.c.l.b16 %v252
    %v683 = vunpack.c.h.b16 %v252
    %v684 = vunpack.c.l.b16 %v253
    %v685 = vunpack.c.h.b16 %v253
    %v686 = vunpack.c.l.b16 %v254
    %v687 = vunpack.c.h.b16 %v254
    %v688 = vunpack.c.l.b16 %v255
    %v689 = vunpack.c.h.b16 %v255
    %v690 = vunpack.c.l.b16 %v256
    %v691 = vunpack.c.h.b16 %v256
    %v692 = vunpack.c.l.b16 %v257
    %v693 = vunpack.c.h.b16 %v257
    %v694 = vunpack.c.l.b16 %v258
    %v695 = vunpack.c.h.b16 %v258
    %v696 = vunpack.c.l.b16 %v259
    %v697 = vunpack.c.h.b16 %v259
    %v698 = vunpack.c.l.b16 %v260
    %v699 = vunpack.c.h.b16 %v260
    %v700 = vunpack.c.l.b16 %v261
    %v701 = vunpack.c.h.b16 %v261
    %v702 = vunpack.c.l.b16 %v262
    %v703 = vunpack.c.h.b16 %v262
    %v704 = vunpack.c.l.b16 %v263
    %v705 = vunpack.c.h.b16 %v263
    %v706 = vunpack.c.l.b16 %v264
    %v707 = vunpack.c.h.b16 %v264
    %v708 = vunpack.c.l.b16 %v265
    %v709 = vunpack.c.h.b16 %v265
    %v710 = vpack.c.b16 %v456, %v454
    %v711 = vpack.c.b16 %v457, %v455
    %v712 = vpack.c.b16 %v460, %v458
    %v713 = vpack.c.b16 %v461, %v459
    %v714 = vpack.c.b16 %v464, %v462
    %v715 = vpack.c.b16 %v465, %v463
    %v716 = vpack.c.b16 %v468, %v466
    %v717 = vpack.c.b16 %v469, %v467
    %v718 = vpack.c.b16 %v472, %v470
    %v719 = vpack.c.b16 %v473, %v471
    %v720 = vpack.c.b16 %v476, %v474
    %v721 = vpack.c.b16 %v477, %v475
    %v722 = vpack.c.b16 %v480, %v478
    %v723 = vpack.c.b16 %v481, %v479
    %v724 = vpack.c.b16 %v484, %v482
    %v725 = vpack.c.b16 %v485, %v483
    %v726 = vpack.c.b16 %v488, %v486
    %v727 = vpack.c.b16 %v489, %v487
    %v728 = vpack.c.b16 %v492, %v490
    %v729 = vpack.c.b16 %v493, %v491
    %v730 = vpack.c.b16 %v496, %v494
    %v731 = vpack.c.b16 %v497, %v495
    %v732 = vpack.c.b16 %v500, %v498
    %v733 = vpack.c.b16 %v501, %v499
    %v734 = vpack.c.b16 %v504, %v502
    %v735 = vpack.c.b16 %v505, %v503
    %v736 = vpack.c.b16 %v508, %v506
    %v737 = vpack.c.b16 %v509, %v507
    %v738 = vpack.c.b16 %v512, %v510
    %v739 = vpack.c.b16 %v513, %v511
    %v740 = vpack.c.b16 %v516, %v514
    %v741 = vpack.c.b16 %v517, %v515
    %v742 = vpack.c.b16 %v520, %v518
    %v743 = vpack.c.b16 %v521, %v519
    %v744 = vpack.c.b16 %v524, %v522
    %v745 = vpack.c.b16 %v525, %v523
    %v746 = vpack.c.b16 %v528, %v526
    %v747 = vpack.c.b16 %v529, %v527
    %v748 = vpack.c.b16 %v532, %v530
    %v749 = vpack.c.b16 %v533, %v531
    %v750 = vpack.c.b16 %v536, %v534
    %v751 = vpack.c.b16 %v537, %v535
    %v752 = vpack.c.b16 %v540, %v538
    %v753 = vpack.c.b16 %v541, %v539
    %v754 = vpack.c.b16 %v544, %v542
    %v755 = vpack.c.b16 %v545, %v543
    %v756 = vpack.c.b16 %v548, %v546
    %v757 = vpack.c.b16 %v549, %v547
    %v758 = vpack.c.b16 %v552, %v550
    %v759 = vpack.c.b16 %v553, %v551
    %v760 = vpack.c.b16 %v556, %v554
    %v761 = vpack.c.b16 %v557, %v555
    %v762 = vpack.c.b16 %v560, %v558
    %v763 = vpack.c.b16 %v561, %v559
    %v764 = vpack.c.b16 %v564, %v562
    %v765 = vpack.c.b16 %v565, %v563
    %v766 = vpack.c.b16 %v568, %v566
    %v767 = vpack.c.b16 %v569, %v567
    %v768 = vpack.c.b16 %v572, %v570
    %v769 = vpack.c.b16 %v573, %v571
    %v770 = vpack.c.b16 %v576, %v574
    %v771 = vpack.c.b16 %v577, %v575
    %v772 = vpack.c.b16 %v580, %v578
    %v773 = vpack.c.b16 %v581, %v579
    %v774 = vpack.c.b16 %v584, %v582
    %v775 = vpack.c.b16 %v585, %v583
    %v776 = vpack.c.b16 %v588, %v586
    %v777 = vpack.c.b16 %v589, %v587
    %v778 = vpack.c.b16 %v592, %v590
    %v779 = vpack.c.b16 %v593, %v591
    %v780 = vpack.c.b16 %v596, %v594
    %v781 = vpack.c.b16 %v597, %v595
    %v782 = vpack.c.b16 %v600, %v598
    %v783 = vpack.c.b16 %v601, %v599
    %v784 = vpack.c.b16 %v604, %v602
    %v785 = vpack.c.b16 %v605, %v603
    %v786 = vpack.c.b16 %v608, %v606
    %v787 = vpack.c.b16 %v609, %v607
    %v788 = vpack.c.b16 %v612, %v610
    %v789 = vpack.c.b16 %v613, %v611
    %v790 = vpack.c.b16 %v616, %v614
    %v791 = vpack.c.b16 %v617, %v615
    %v792 = vpack.c.b16 %v620, %v618
    %v793 = vpack.c.b16 %v621, %v619
    %v794 = vpack.c.b16 %v624, %v622
    %v795 = vpack.c.b16 %v625, %v623
    %v796 = vpack.c.b16 %v628, %v626
    %v797 = vpack.c.b16 %v629, %v627
    %v798 = vpack.c.b16 %v632, %v630
    %v799 = vpack.c.b16 %v633, %v631
    %v800 = vpack.c.b16 %v636, %v634
    %v801 = vpack.c.b16 %v637, %v635
    %v802 = vpack.c.b16 %v640, %v638
    %v803 = vpack.c.b16 %v641, %v639
    %v804 = vpack.c.b16 %v644, %v642
    %v805 = vpack.c.b16 %v645, %v643
    %v806 = vpack.c.b16 %v648, %v646
    %v807 = vpack.c.b16 %v649, %v647
    %v808 = vpack.c.b16 %v652, %v650
    %v809 = vpack.c.b16 %v653, %v651
    %v810 = vpack.c.b16 %v656, %v654
    %v811 = vpack.c.b16 %v657, %v655
    %v812 = vpack.c.b16 %v660, %v658
    %v813 = vpack.c.b16 %v661, %v659
    %v814 = vpack.c.b16 %v664, %v662
    %v815 = vpack.c.b16 %v665, %v663
    %v816 = vpack.c.b16 %v668, %v666
    %v817 = vpack.c.b16 %v669, %v667
    %v818 = vpack.c.b16 %v672, %v670
    %v819 = vpack.c.b16 %v673, %v671
    %v820 = vpack.c.b16 %v676, %v674
    %v821 = vpack.c.b16 %v677, %v675
    %v822 = vpack.c.b16 %v680, %v678
    %v823 = vpack.c.b16 %v681, %v679
    %v824 = vpack.c.b16 %v684, %v682
    %v825 = vpack.c.b16 %v685, %v683
    %v826 = vpack.c.b16 %v688, %v686
    %v827 = vpack.c.b16 %v689, %v687
    %v828 = vpack.c.b16 %v692, %v690
    %v829 = vpack.c.b16 %v693, %v691
    %v830 = vpack.c.b16 %v696, %v694
    %v831 = vpack.c.b16 %v697, %v695
    %v832 = vpack.c.b16 %v700, %v698
    %v833 = vpack.c.b16 %v701, %v699
    %v834 = vpack.c.b16 %v704, %v702
    %v835 = vpack.c.b16 %v705, %v703
    %v836 = vpack.c.b16 %v708, %v706
    %v837 = vpack.c.b16 %v709, %v707
    %966 = vmatprep.subr.bf16.mxu0 %v725
    %967 = vmatpush1.bf16.msra.mxu0 %v724
    %968 = vmatprep.subr.bf16.mxu0 %v723
    %969 = vmatpush1.bf16.msra.mxu0 %v722
    %970 = vmatprep.subr.bf16.mxu0 %v721
    %971 = vmatpush1.bf16.msra.mxu0 %v720
    %972 = vmatprep.subr.bf16.mxu0 %v719
    %973 = vmatpush1.bf16.msra.mxu0 %v718
    %974 = vmatprep.subr.bf16.mxu0 %v717
    %975 = vmatpush1.bf16.msra.mxu0 %v716
    %976 = vmatprep.subr.bf16.mxu0 %v715
    %977 = vmatpush1.bf16.msra.mxu0 %v714
    %978 = vmatprep.subr.bf16.mxu0 %v713
    %979 = vmatpush1.bf16.msra.mxu0 %v712
    %980 = vmatprep.subr.bf16.mxu0 %v711
    %981 = vmatpush1.bf16.msra.mxu0 %v710
    %982 = vmatprep.subr.bf16.mxu0 %v741
    %983 = vmatpush2.bf16.msra.mxu0 %v740
    %984 = vmatprep.subr.bf16.mxu0 %v739
    %985 = vmatpush2.bf16.msra.mxu0 %v738
    %986 = vmatprep.subr.bf16.mxu0 %v737
    %987 = vmatpush2.bf16.msra.mxu0 %v736
    %988 = vmatprep.subr.bf16.mxu0 %v735
    %989 = vmatpush2.bf16.msra.mxu0 %v734
    %990 = vmatprep.subr.bf16.mxu0 %v733
    %991 = vmatpush2.bf16.msra.mxu0 %v732
    %992 = vmatprep.subr.bf16.mxu0 %v731
    %993 = vmatpush2.bf16.msra.mxu0 %v730
    %994 = vmatprep.subr.bf16.mxu0 %v729
    %995 = vmatpush2.bf16.msra.mxu0 %v728
    %996 = vmatprep.subr.bf16.mxu0 %v727
    %997 = vmatpush2.bf16.msra.mxu0 %v726
    %998 = vmatprep.mubr.bf16.mxu0 %v311
    %999 = vmatmul.mubr.bf16.gmra.mxu0 %v310
    %v1000 = vpop.f32.mrf.mxu0
    %v1001 = vadd.f32 %v279, %v1000
    %v1002 = vpop.f32.mrf.mxu0
    %v1003 = vadd.f32 %v283, %v1002
    %v1004 = vpop.f32.mrf.mxu0
    %v1005 = vadd.f32 %v279, %v1004
    %v1006 = vpop.f32.mrf.mxu0
    %v1007 = vadd.f32 %v283, %v1006
    %1008 = vdwg.mxu0
    %1009 = vmatprep.subr.bf16.mxu0 %v757
    %1010 = vmatpush1.bf16.msra.mxu0 %v756
    %1011 = vmatprep.subr.bf16.mxu0 %v755
    %1012 = vmatpush1.bf16.msra.mxu0 %v754
    %1013 = vmatprep.subr.bf16.mxu0 %v753
    %1014 = vmatpush1.bf16.msra.mxu0 %v752
    %1015 = vmatprep.subr.bf16.mxu0 %v751
    %1016 = vmatpush1.bf16.msra.mxu0 %v750
    %1017 = vmatprep.subr.bf16.mxu0 %v749
    %1018 = vmatpush1.bf16.msra.mxu0 %v748
    %1019 = vmatprep.subr.bf16.mxu0 %v747
    %1020 = vmatpush1.bf16.msra.mxu0 %v746
    %1021 = vmatprep.subr.bf16.mxu0 %v745
    %1022 = vmatpush1.bf16.msra.mxu0 %v744
    %1023 = vmatprep.subr.bf16.mxu0 %v743
    %1024 = vmatpush1.bf16.msra.mxu0 %v742
    %1025 = vmatprep.subr.bf16.mxu0 %v773
    %1026 = vmatpush2.bf16.msra.mxu0 %v772
    %1027 = vmatprep.subr.bf16.mxu0 %v771
    %1028 = vmatpush2.bf16.msra.mxu0 %v770
    %1029 = vmatprep.subr.bf16.mxu0 %v769
    %1030 = vmatpush2.bf16.msra.mxu0 %v768
    %1031 = vmatprep.subr.bf16.mxu0 %v767
    %1032 = vmatpush2.bf16.msra.mxu0 %v766
    %1033 = vmatprep.subr.bf16.mxu0 %v765
    %1034 = vmatpush2.bf16.msra.mxu0 %v764
    %1035 = vmatprep.subr.bf16.mxu0 %v763
    %1036 = vmatpush2.bf16.msra.mxu0 %v762
    %1037 = vmatprep.subr.bf16.mxu0 %v761
    %1038 = vmatpush2.bf16.msra.mxu0 %v760
    %1039 = vmatprep.subr.bf16.mxu0 %v759
    %1040 = vmatpush2.bf16.msra.mxu0 %v758
    %1041 = vmatprep.mubr.bf16.mxu0 %v313
    %1042 = vmatmul.mubr.bf16.gmra.mxu0 %v312
    %v1043 = vpop.f32.mrf.mxu0
    %v1044 = vadd.f32 %v1001, %v1043
    %v1045 = vpop.f32.mrf.mxu0
    %v1046 = vadd.f32 %v1003, %v1045
    %v1047 = vpop.f32.mrf.mxu0
    %v1048 = vadd.f32 %v1005, %v1047
    %v1049 = vpop.f32.mrf.mxu0
    %v1050 = vadd.f32 %v1007, %v1049
    %1051 = vdwg.mxu0
    %1052 = vmatprep.subr.bf16.mxu0 %v789
    %1053 = vmatpush1.bf16.msra.mxu0 %v788
    %1054 = vmatprep.subr.bf16.mxu0 %v787
    %1055 = vmatpush1.bf16.msra.mxu0 %v786
    %1056 = vmatprep.subr.bf16.mxu0 %v785
    %1057 = vmatpush1.bf16.msra.mxu0 %v784
    %1058 = vmatprep.subr.bf16.mxu0 %v783
    %1059 = vmatpush1.bf16.msra.mxu0 %v782
    %1060 = vmatprep.subr.bf16.mxu0 %v781
    %1061 = vmatpush1.bf16.msra.mxu0 %v780
    %1062 = vmatprep.subr.bf16.mxu0 %v779
    %1063 = vmatpush1.bf16.msra.mxu0 %v778
    %1064 = vmatprep.subr.bf16.mxu0 %v777
    %1065 = vmatpush1.bf16.msra.mxu0 %v776
    %1066 = vmatprep.subr.bf16.mxu0 %v775
    %1067 = vmatpush1.bf16.msra.mxu0 %v774
    %1068 = vmatprep.subr.bf16.mxu0 %v805
    %1069 = vmatpush2.bf16.msra.mxu0 %v804
    %1070 = vmatprep.subr.bf16.mxu0 %v803
    %1071 = vmatpush2.bf16.msra.mxu0 %v802
    %1072 = vmatprep.subr.bf16.mxu0 %v801
    %1073 = vmatpush2.bf16.msra.mxu0 %v800
    %1074 = vmatprep.subr.bf16.mxu0 %v799
    %1075 = vmatpush2.bf16.msra.mxu0 %v798
    %1076 = vmatprep.subr.bf16.mxu0 %v797
    %1077 = vmatpush2.bf16.msra.mxu0 %v796
    %1078 = vmatprep.subr.bf16.mxu0 %v795
    %1079 = vmatpush2.bf16.msra.mxu0 %v794
    %1080 = vmatprep.subr.bf16.mxu0 %v793
    %1081 = vmatpush2.bf16.msra.mxu0 %v792
    %1082 = vmatprep.subr.bf16.mxu0 %v791
    %1083 = vmatpush2.bf16.msra.mxu0 %v790
    %1084 = vmatprep.mubr.bf16.mxu0 %v315
    %1085 = vmatmul.mubr.bf16.gmra.mxu0 %v314
    %v1086 = vpop.f32.mrf.mxu0
    %v1087 = vadd.f32 %v1044, %v1086
    %v1088 = vpop.f32.mrf.mxu0
    %v1089 = vadd.f32 %v1046, %v1088
    %v1090 = vpop.f32.mrf.mxu0
    %v1091 = vadd.f32 %v1048, %v1090
    %v1092 = vpop.f32.mrf.mxu0
    %v1093 = vadd.f32 %v1050, %v1092
    %1094 = vdwg.mxu0
    %1095 = vmatprep.subr.bf16.mxu0 %v821
    %1096 = vmatpush1.bf16.msra.mxu0 %v820
    %1097 = vmatprep.subr.bf16.mxu0 %v819
    %1098 = vmatpush1.bf16.msra.mxu0 %v818
    %1099 = vmatprep.subr.bf16.mxu0 %v817
    %1100 = vmatpush1.bf16.msra.mxu0 %v816
    %1101 = vmatprep.subr.bf16.mxu0 %v815
    %1102 = vmatpush1.bf16.msra.mxu0 %v814
    %1103 = vmatprep.subr.bf16.mxu0 %v813
    %1104 = vmatpush1.bf16.msra.mxu0 %v812
    %1105 = vmatprep.subr.bf16.mxu0 %v811
    %1106 = vmatpush1.bf16.msra.mxu0 %v810
    %1107 = vmatprep.subr.bf16.mxu0 %v809
    %1108 = vmatpush1.bf16.msra.mxu0 %v808
    %1109 = vmatprep.subr.bf16.mxu0 %v807
    %1110 = vmatpush1.bf16.msra.mxu0 %v806
    %1111 = vmatprep.subr.bf16.mxu0 %v837
    %1112 = vmatpush2.bf16.msra.mxu0 %v836
    %1113 = vmatprep.subr.bf16.mxu0 %v835
    %1114 = vmatpush2.bf16.msra.mxu0 %v834
    %1115 = vmatprep.subr.bf16.mxu0 %v833
    %1116 = vmatpush2.bf16.msra.mxu0 %v832
    %1117 = vmatprep.subr.bf16.mxu0 %v831
    %1118 = vmatpush2.bf16.msra.mxu0 %v830
    %1119 = vmatprep.subr.bf16.mxu0 %v829
    %1120 = vmatpush2.bf16.msra.mxu0 %v828
    %1121 = vmatprep.subr.bf16.mxu0 %v827
    %1122 = vmatpush2.bf16.msra.mxu0 %v826
    %1123 = vmatprep.subr.bf16.mxu0 %v825
    %1124 = vmatpush2.bf16.msra.mxu0 %v824
    %1125 = vmatprep.subr.bf16.mxu0 %v823
    %1126 = vmatpush2.bf16.msra.mxu0 %v822
    %1127 = vmatprep.mubr.bf16.mxu0 %v317
    %1128 = vmatmul.mubr.bf16.gmra.mxu0 %v316
    %v1129 = vpop.f32.mrf.mxu0
    %v1130 = vadd.f32 %v1087, %v1129
    %v1131 = vpop.f32.mrf.mxu0
    %v1132 = vadd.f32 %v1089, %v1131
    %v1133 = vpop.f32.mrf.mxu0
    %v1134 = vadd.f32 %v1091, %v1133
    %v1135 = vpop.f32.mrf.mxu0
    %v1136 = vadd.f32 %v1093, %v1135
    %1137 = vdwg.mxu0
    %v1138 = vmax.f32 %v1130, 0.0
    %v1139 = vmax.f32 %v1132, 0.0
    %v1140 = vmax.f32 %v1134, 0.0
    %v1141 = vmax.f32 %v1136, 0.0
    %v1142 = vpack.c.bf16 %v1140, %v1138
    %v1143 = vld [vmem:[#allocation8] sm:$0xf]
    %v1144 = vld [vmem:[#allocation8 + $0x4] sm:$0xf]
    %v1145 = vld [vmem:[#allocation8 + $0x8] sm:$0xf]
    %v1146 = vld [vmem:[#allocation8 + $0xc] sm:$0xf]
    %v1147 = vld [vmem:[#allocation8 + $0x10] sm:$0xf]
    %v1148 = vld [vmem:[#allocation8 + $0x14] sm:$0xf]
    %v1149 = vld [vmem:[#allocation8 + $0x18] sm:$0xf]
    %v1150 = vld [vmem:[#allocation8 + $0x1c] sm:$0xf]
    %v1151 = vld [vmem:[#allocation8 + $0x20] sm:$0xf]
    %v1152 = vld [vmem:[#allocation8 + $0x24] sm:$0xf]
    %v1153 = vld [vmem:[#allocation8 + $0x28] sm:$0xf]
    %v1154 = vld [vmem:[#allocation8 + $0x2c] sm:$0xf]
    %v1155 = vld [vmem:[#allocation8 + $0x30] sm:$0xf]
    %v1156 = vld [vmem:[#allocation8 + $0x34] sm:$0xf]
    %v1157 = vld [vmem:[#allocation8 + $0x38] sm:$0xf]
    %v1158 = vld [vmem:[#allocation8 + $0x3c] sm:$0xf]
    %v1159 = vld [vmem:[%s5] sm:$0x1]
    %v1161 = vlaneseq
    %v1162 = vshrl.u32 %v1161, 7
    %v1163 = vsub.s32 0, %v1162
    %v1164 = vrot.slane %v1159, %v1163
    %v1182 = vunpack.c.l.b16 %v1143
    %v1183 = vunpack.c.l.b16 %v1144
    %v1184 = vunpack.c.l.b16 %v1145
    %v1185 = vunpack.c.l.b16 %v1146
    %v1186 = vunpack.c.l.b16 %v1147
    %v1187 = vunpack.c.l.b16 %v1148
    %v1188 = vunpack.c.l.b16 %v1149
    %v1189 = vunpack.c.l.b16 %v1150
    %v1190 = vunpack.c.l.b16 %v1151
    %v1191 = vunpack.c.l.b16 %v1152
    %v1192 = vunpack.c.l.b16 %v1153
    %v1193 = vunpack.c.l.b16 %v1154
    %v1194 = vunpack.c.l.b16 %v1155
    %v1195 = vunpack.c.l.b16 %v1156
    %v1196 = vunpack.c.l.b16 %v1157
    %v1197 = vunpack.c.l.b16 %v1158
    %v1198 = vpack.c.b16 %v1183, %v1182
    %v1199 = vpack.c.b16 %v1185, %v1184
    %v1200 = vpack.c.b16 %v1187, %v1186
    %v1201 = vpack.c.b16 %v1189, %v1188
    %v1202 = vpack.c.b16 %v1191, %v1190
    %v1203 = vpack.c.b16 %v1193, %v1192
    %v1204 = vpack.c.b16 %v1195, %v1194
    %v1205 = vpack.c.b16 %v1197, %v1196
    %1214 = vmatprep.subr.bf16.mxu0 0
    %1215 = vmatpush1.bf16.msra.mxu0 %v1205
    %1216 = vmatprep.subr.bf16.mxu0 0
    %1217 = vmatpush1.bf16.msra.mxu0 %v1204
    %1218 = vmatprep.subr.bf16.mxu0 0
    %1219 = vmatpush1.bf16.msra.mxu0 %v1203
    %1220 = vmatprep.subr.bf16.mxu0 0
    %1221 = vmatpush1.bf16.msra.mxu0 %v1202
    %1222 = vmatprep.subr.bf16.mxu0 0
    %1223 = vmatpush1.bf16.msra.mxu0 %v1201
    %1224 = vmatprep.subr.bf16.mxu0 0
    %1225 = vmatpush1.bf16.msra.mxu0 %v1200
    %1226 = vmatprep.subr.bf16.mxu0 0
    %1227 = vmatpush1.bf16.msra.mxu0 %v1199
    %1228 = vmatprep.subr.bf16.mxu0 0
    %1229 = vmatpush1.bf16.msra.mxu0 %v1198
    %1230 = vmatprep.subr.bf16.mxu0 0
    %1231 = vmatpush2.bf16.msra.mxu0 0
    %1232 = vmatprep.subr.bf16.mxu0 0
    %1233 = vmatpush2.bf16.msra.mxu0 0
    %1234 = vmatprep.subr.bf16.mxu0 0
    %1235 = vmatpush2.bf16.msra.mxu0 0
    %1236 = vmatprep.subr.bf16.mxu0 0
    %1237 = vmatpush2.bf16.msra.mxu0 0
    %1238 = vmatprep.subr.bf16.mxu0 0
    %1239 = vmatpush2.bf16.msra.mxu0 0
    %1240 = vmatprep.subr.bf16.mxu0 0
    %1241 = vmatpush2.bf16.msra.mxu0 0
    %1242 = vmatprep.subr.bf16.mxu0 0
    %1243 = vmatpush2.bf16.msra.mxu0 0
    %1244 = vmatprep.subr.bf16.mxu0 0
    %1245 = vmatpush2.bf16.msra.mxu0 0
    %1246 = vmatprep.mubr.bf16.mxu0 0
    %1247 = vmatmul.mubr.bf16.gmra.mxu0 %v1142
    %v1248 = vpop.f32.mrf.mxu0
    %v1249 = vadd.f32 %v1164, %v1248
    %v1250 = vpop.f32.mrf.mxu0
    %v1251 = vpop.f32.mrf.mxu0
    %v1252 = vadd.f32 %v1164, %v1251
    %v1253 = vpop.f32.mrf.mxu0
    %1254 = vdwg.mxu0
    %v1255 = vpack.c.bf16 %v1252, %v1249
    %v1256 = vld [vmem:[#allocation10] sm:$0xf]
    %v1257 = vld [vmem:[#allocation10 + $0x4] sm:$0xf]
    %v1258 = vld [vmem:[#allocation10 + $0x8] sm:$0xf]
    %v1259 = vld [vmem:[#allocation10 + $0xc] sm:$0xf]
    %v1260 = vld [vmem:[#allocation10 + $0x10] sm:$0xf]
    %v1261 = vld [vmem:[#allocation10 + $0x14] sm:$0xf]
    %v1262 = vld [vmem:[#allocation10 + $0x18] sm:$0xf]
    %v1263 = vld [vmem:[#allocation10 + $0x1c] sm:$0xf]
    %v1264 = vld [vmem:[#allocation10 + $0x20] sm:$0xf]
    %v1265 = vld [vmem:[#allocation10 + $0x24] sm:$0xf]
    %v1266 = vld [vmem:[#allocation10 + $0x28] sm:$0xf]
    %v1267 = vld [vmem:[#allocation10 + $0x2c] sm:$0xf]
    %v1268 = vld [vmem:[#allocation10 + $0x30] sm:$0xf]
    %v1269 = vld [vmem:[#allocation10 + $0x34] sm:$0xf]
    %v1270 = vld [vmem:[#allocation10 + $0x38] sm:$0xf]
    %v1271 = vld [vmem:[#allocation10 + $0x3c] sm:$0xf]
    %v1272 = vld [vmem:[%s7] sm:$0x1]
    %v1274 = vlaneseq
    %v1275 = vshrl.u32 %v1274, 7
    %v1276 = vsub.s32 0, %v1275
    %v1277 = vrot.slane %v1272, %v1276
    %v1295 = vunpack.c.l.b16 %v1256
    %v1296 = vunpack.c.l.b16 %v1257
    %v1297 = vunpack.c.l.b16 %v1258
    %v1298 = vunpack.c.l.b16 %v1259
    %v1299 = vunpack.c.l.b16 %v1260
    %v1300 = vunpack.c.l.b16 %v1261
    %v1301 = vunpack.c.l.b16 %v1262
    %v1302 = vunpack.c.l.b16 %v1263
    %v1303 = vunpack.c.l.b16 %v1264
    %v1304 = vunpack.c.l.b16 %v1265
    %v1305 = vunpack.c.l.b16 %v1266
    %v1306 = vunpack.c.l.b16 %v1267
    %v1307 = vunpack.c.l.b16 %v1268
    %v1308 = vunpack.c.l.b16 %v1269
    %v1309 = vunpack.c.l.b16 %v1270
    %v1310 = vunpack.c.l.b16 %v1271
    %v1311 = vpack.c.b16 %v1296, %v1295
    %v1312 = vpack.c.b16 %v1298, %v1297
    %v1313 = vpack.c.b16 %v1300, %v1299
    %v1314 = vpack.c.b16 %v1302, %v1301
    %v1315 = vpack.c.b16 %v1304, %v1303
    %v1316 = vpack.c.b16 %v1306, %v1305
    %v1317 = vpack.c.b16 %v1308, %v1307
    %v1318 = vpack.c.b16 %v1310, %v1309
    %1327 = vmatprep.subr.bf16.mxu0 0
    %1328 = vmatpush1.bf16.msra.mxu0 %v1318
    %1329 = vmatprep.subr.bf16.mxu0 0
    %1330 = vmatpush1.bf16.msra.mxu0 %v1317
    %1331 = vmatprep.subr.bf16.mxu0 0
    %1332 = vmatpush1.bf16.msra.mxu0 %v1316
    %1333 = vmatprep.subr.bf16.mxu0 0
    %1334 = vmatpush1.bf16.msra.mxu0 %v1315
    %1335 = vmatprep.subr.bf16.mxu0 0
    %1336 = vmatpush1.bf16.msra.mxu0 %v1314
    %1337 = vmatprep.subr.bf16.mxu0 0
    %1338 = vmatpush1.bf16.msra.mxu0 %v1313
    %1339 = vmatprep.subr.bf16.mxu0 0
    %1340 = vmatpush1.bf16.msra.mxu0 %v1312
    %1341 = vmatprep.subr.bf16.mxu0 0
    %1342 = vmatpush1.bf16.msra.mxu0 %v1311
    %1343 = vmatprep.subr.bf16.mxu0 0
    %1344 = vmatpush2.bf16.msra.mxu0 0
    %1345 = vmatprep.subr.bf16.mxu0 0
    %1346 = vmatpush2.bf16.msra.mxu0 0
    %1347 = vmatprep.subr.bf16.mxu0 0
    %1348 = vmatpush2.bf16.msra.mxu0 0
    %1349 = vmatprep.subr.bf16.mxu0 0
    %1350 = vmatpush2.bf16.msra.mxu0 0
    %1351 = vmatprep.subr.bf16.mxu0 0
    %1352 = vmatpush2.bf16.msra.mxu0 0
    %1353 = vmatprep.subr.bf16.mxu0 0
    %1354 = vmatpush2.bf16.msra.mxu0 0
    %1355 = vmatprep.subr.bf16.mxu0 0
    %1356 = vmatpush2.bf16.msra.mxu0 0
    %1357 = vmatprep.subr.bf16.mxu0 0
    %1358 = vmatpush2.bf16.msra.mxu0 0
    %1359 = vmatprep.mubr.bf16.mxu0 0
    %1360 = vmatmul.mubr.bf16.gmra.mxu0 %v1255
    %v1361 = vpop.f32.mrf.mxu0
    %v1362 = vadd.f32 %v1277, %v1361
    %v1363 = vpop.f32.mrf.mxu0
    %v1364 = vpop.f32.mrf.mxu0
    %v1365 = vadd.f32 %v1277, %v1364
    %v1366 = vpop.f32.mrf.mxu0
    %1367 = vdwg.mxu0
    %v1368 = vmax.f32 %v1362, 0.0
    %v1369 = vmax.f32 %v1365, 0.0
    %v1370 = vpack.c.bf16 %v1369, %v1368
    %v1371 = vld [vmem:[#allocation11] sm:$0xf]
    %v1372 = vld [vmem:[#allocation11 + $0x4] sm:$0xf]
    %v1373 = vld [vmem:[#allocation11 + $0x8] sm:$0xf]
    %v1374 = vld [vmem:[#allocation11 + $0xc] sm:$0xf]
    %v1375 = vld [vmem:[#allocation11 + $0x10] sm:$0xf]
    %v1376 = vld [vmem:[#allocation11 + $0x14] sm:$0xf]
    %v1377 = vld [vmem:[#allocation11 + $0x18] sm:$0xf]
    %v1378 = vld [vmem:[#allocation11 + $0x1c] sm:$0xf]
    %v1379 = vld [vmem:[#allocation11 + $0x20] sm:$0xf]
    %v1380 = vld [vmem:[#allocation11 + $0x24] sm:$0xf]
    %v1381 = vld [vmem:[#allocation11 + $0x28] sm:$0xf]
    %v1382 = vld [vmem:[#allocation11 + $0x2c] sm:$0xf]
    %v1383 = vld [vmem:[#allocation11 + $0x30] sm:$0xf]
    %v1384 = vld [vmem:[#allocation11 + $0x34] sm:$0xf]
    %v1385 = vld [vmem:[#allocation11 + $0x38] sm:$0xf]
    %v1386 = vld [vmem:[#allocation11 + $0x3c] sm:$0xf]
    %v1387 = vld [vmem:[%s9] sm:$0x1]
    %v1389 = vlaneseq
    %v1390 = vshrl.u32 %v1389, 7
    %v1391 = vsub.s32 0, %v1390
    %v1392 = vrot.slane %v1387, %v1391
    %v1410 = vunpack.c.l.b16 %v1371
    %v1411 = vunpack.c.l.b16 %v1372
    %v1412 = vunpack.c.l.b16 %v1373
    %v1413 = vunpack.c.l.b16 %v1374
    %v1414 = vunpack.c.l.b16 %v1375
    %v1415 = vunpack.c.l.b16 %v1376
    %v1416 = vunpack.c.l.b16 %v1377
    %v1417 = vunpack.c.l.b16 %v1378
    %v1418 = vunpack.c.l.b16 %v1379
    %v1419 = vunpack.c.l.b16 %v1380
    %v1420 = vunpack.c.l.b16 %v1381
    %v1421 = vunpack.c.l.b16 %v1382
    %v1422 = vunpack.c.l.b16 %v1383
    %v1423 = vunpack.c.l.b16 %v1384
    %v1424 = vunpack.c.l.b16 %v1385
    %v1425 = vunpack.c.l.b16 %v1386
    %v1426 = vpack.c.b16 %v1411, %v1410
    %v1427 = vpack.c.b16 %v1413, %v1412
    %v1428 = vpack.c.b16 %v1415, %v1414
    %v1429 = vpack.c.b16 %v1417, %v1416
    %v1430 = vpack.c.b16 %v1419, %v1418
    %v1431 = vpack.c.b16 %v1421, %v1420
    %v1432 = vpack.c.b16 %v1423, %v1422
    %v1433 = vpack.c.b16 %v1425, %v1424
    %1442 = vmatprep.subr.bf16.mxu0 0
    %1443 = vmatpush1.bf16.msra.mxu0 %v1433
    %1444 = vmatprep.subr.bf16.mxu0 0
    %1445 = vmatpush1.bf16.msra.mxu0 %v1432
    %1446 = vmatprep.subr.bf16.mxu0 0
    %1447 = vmatpush1.bf16.msra.mxu0 %v1431
    %1448 = vmatprep.subr.bf16.mxu0 0
    %1449 = vmatpush1.bf16.msra.mxu0 %v1430
    %1450 = vmatprep.subr.bf16.mxu0 0
    %1451 = vmatpush1.bf16.msra.mxu0 %v1429
    %1452 = vmatprep.subr.bf16.mxu0 0
    %1453 = vmatpush1.bf16.msra.mxu0 %v1428
    %1454 = vmatprep.subr.bf16.mxu0 0
    %1455 = vmatpush1.bf16.msra.mxu0 %v1427
    %1456 = vmatprep.subr.bf16.mxu0 0
    %1457 = vmatpush1.bf16.msra.mxu0 %v1426
    %1458 = vmatprep.subr.bf16.mxu0 0
    %1459 = vmatpush2.bf16.msra.mxu0 0
    %1460 = vmatprep.subr.bf16.mxu0 0
    %1461 = vmatpush2.bf16.msra.mxu0 0
    %1462 = vmatprep.subr.bf16.mxu0 0
    %1463 = vmatpush2.bf16.msra.mxu0 0
    %1464 = vmatprep.subr.bf16.mxu0 0
    %1465 = vmatpush2.bf16.msra.mxu0 0
    %1466 = vmatprep.subr.bf16.mxu0 0
    %1467 = vmatpush2.bf16.msra.mxu0 0
    %1468 = vmatprep.subr.bf16.mxu0 0
    %1469 = vmatpush2.bf16.msra.mxu0 0
    %1470 = vmatprep.subr.bf16.mxu0 0
    %1471 = vmatpush2.bf16.msra.mxu0 0
    %1472 = vmatprep.subr.bf16.mxu0 0
    %1473 = vmatpush2.bf16.msra.mxu0 0
    %1474 = vmatprep.mubr.bf16.mxu0 0
    %1475 = vmatmul.mubr.bf16.gmra.mxu0 %v1370
    %v1476 = vpop.f32.mrf.mxu0
    %v1477 = vadd.f32 %v1392, %v1476
    %v1478 = vpop.f32.mrf.mxu0
    %v1479 = vpop.f32.mrf.mxu0
    %v1480 = vadd.f32 %v1392, %v1479
    %v1481 = vpop.f32.mrf.mxu0
    %1482 = vdwg.mxu0
    %v1483 = vpack.c.bf16 %v1141, %v1139
    %v1484 = vld [vmem:[#allocation13] sm:$0xf]
    %v1485 = vld [vmem:[#allocation13 + $0x4] sm:$0xf]
    %v1486 = vld [vmem:[#allocation13 + $0x8] sm:$0xf]
    %v1487 = vld [vmem:[#allocation13 + $0xc] sm:$0xf]
    %v1488 = vld [vmem:[#allocation13 + $0x10] sm:$0xf]
    %v1489 = vld [vmem:[#allocation13 + $0x14] sm:$0xf]
    %v1490 = vld [vmem:[#allocation13 + $0x18] sm:$0xf]
    %v1491 = vld [vmem:[#allocation13 + $0x1c] sm:$0xf]
    %v1492 = vld [vmem:[#allocation13 + $0x20] sm:$0xf]
    %v1493 = vld [vmem:[#allocation13 + $0x24] sm:$0xf]
    %v1494 = vld [vmem:[#allocation13 + $0x28] sm:$0xf]
    %v1495 = vld [vmem:[#allocation13 + $0x2c] sm:$0xf]
    %v1496 = vld [vmem:[#allocation13 + $0x30] sm:$0xf]
    %v1497 = vld [vmem:[#allocation13 + $0x34] sm:$0xf]
    %v1498 = vld [vmem:[#allocation13 + $0x38] sm:$0xf]
    %v1499 = vld [vmem:[#allocation13 + $0x3c] sm:$0xf]
    %v1500 = vld [vmem:[%s11] sm:$0x1]
    %v1502 = vlaneseq
    %v1503 = vshrl.u32 %v1502, 7
    %v1504 = vsub.s32 0, %v1503
    %v1505 = vrot.slane %v1500, %v1504
    %v1523 = vunpack.c.l.b16 %v1484
    %v1524 = vunpack.c.l.b16 %v1485
    %v1525 = vunpack.c.l.b16 %v1486
    %v1526 = vunpack.c.l.b16 %v1487
    %v1527 = vunpack.c.l.b16 %v1488
    %v1528 = vunpack.c.l.b16 %v1489
    %v1529 = vunpack.c.l.b16 %v1490
    %v1530 = vunpack.c.l.b16 %v1491
    %v1531 = vunpack.c.l.b16 %v1492
    %v1532 = vunpack.c.l.b16 %v1493
    %v1533 = vunpack.c.l.b16 %v1494
    %v1534 = vunpack.c.l.b16 %v1495
    %v1535 = vunpack.c.l.b16 %v1496
    %v1536 = vunpack.c.l.b16 %v1497
    %v1537 = vunpack.c.l.b16 %v1498
    %v1538 = vunpack.c.l.b16 %v1499
    %v1539 = vpack.c.b16 %v1524, %v1523
    %v1540 = vpack.c.b16 %v1526, %v1525
    %v1541 = vpack.c.b16 %v1528, %v1527
    %v1542 = vpack.c.b16 %v1530, %v1529
    %v1543 = vpack.c.b16 %v1532, %v1531
    %v1544 = vpack.c.b16 %v1534, %v1533
    %v1545 = vpack.c.b16 %v1536, %v1535
    %v1546 = vpack.c.b16 %v1538, %v1537
    %1555 = vmatprep.subr.bf16.mxu0 0
    %1556 = vmatpush1.bf16.msra.mxu0 %v1546
    %1557 = vmatprep.subr.bf16.mxu0 0
    %1558 = vmatpush1.bf16.msra.mxu0 %v1545
    %1559 = vmatprep.subr.bf16.mxu0 0
    %1560 = vmatpush1.bf16.msra.mxu0 %v1544
    %1561 = vmatprep.subr.bf16.mxu0 0
    %1562 = vmatpush1.bf16.msra.mxu0 %v1543
    %1563 = vmatprep.subr.bf16.mxu0 0
    %1564 = vmatpush1.bf16.msra.mxu0 %v1542
    %1565 = vmatprep.subr.bf16.mxu0 0
    %1566 = vmatpush1.bf16.msra.mxu0 %v1541
    %1567 = vmatprep.subr.bf16.mxu0 0
    %1568 = vmatpush1.bf16.msra.mxu0 %v1540
    %1569 = vmatprep.subr.bf16.mxu0 0
    %1570 = vmatpush1.bf16.msra.mxu0 %v1539
    %1571 = vmatprep.subr.bf16.mxu0 0
    %1572 = vmatpush2.bf16.msra.mxu0 0
    %1573 = vmatprep.subr.bf16.mxu0 0
    %1574 = vmatpush2.bf16.msra.mxu0 0
    %1575 = vmatprep.subr.bf16.mxu0 0
    %1576 = vmatpush2.bf16.msra.mxu0 0
    %1577 = vmatprep.subr.bf16.mxu0 0
    %1578 = vmatpush2.bf16.msra.mxu0 0
    %1579 = vmatprep.subr.bf16.mxu0 0
    %1580 = vmatpush2.bf16.msra.mxu0 0
    %1581 = vmatprep.subr.bf16.mxu0 0
    %1582 = vmatpush2.bf16.msra.mxu0 0
    %1583 = vmatprep.subr.bf16.mxu0 0
    %1584 = vmatpush2.bf16.msra.mxu0 0
    %1585 = vmatprep.subr.bf16.mxu0 0
    %1586 = vmatpush2.bf16.msra.mxu0 0
    %1587 = vmatprep.mubr.bf16.mxu0 0
    %1588 = vmatmul.mubr.bf16.gmra.mxu0 %v1483
    %v1589 = vpop.f32.mrf.mxu0
    %v1590 = vadd.f32 %v1505, %v1589
    %v1591 = vpop.f32.mrf.mxu0
    %v1592 = vpop.f32.mrf.mxu0
    %v1593 = vadd.f32 %v1505, %v1592
    %v1594 = vpop.f32.mrf.mxu0
    %1595 = vdwg.mxu0
    %1596 = vst [vmem:[#allocation14] sm:$0xff] %v1477
    %1597 = vst [vmem:[#allocation14 + $0x20] sm:$0xff] %v1480
    %1598 = vst [vmem:[#allocation14 + $0x8] sm:$0xff] %v1590
    %1599 = vst [vmem:[#allocation14 + $0x28] sm:$0xff] %v1593
    %v1600 = vld [vmem:[#allocation5] sm:$0xff]
    %v1601 = vld [vmem:[#allocation5 + $0x8] sm:$0xff]
    %v1602 = vld [vmem:[#allocation5 + $0x10] sm:$0xff]
    %v1603 = vld [vmem:[#allocation5 + $0x18] sm:$0xff]
    %v1604 = vld [vmem:[#allocation5 + $0x20] sm:$0xff]
    %v1605 = vld [vmem:[#allocation5 + $0x28] sm:$0xff]
    %v1606 = vld [vmem:[#allocation5 + $0x30] sm:$0xff]
    %v1607 = vld [vmem:[#allocation5 + $0x38] sm:$0xff]
    %v1616 = vunpack.c.l.b16 %v1600
    %v1617 = vunpack.c.h.b16 %v1600
    %v1618 = vunpack.c.l.b16 %v1601
    %v1619 = vunpack.c.h.b16 %v1601
    %v1620 = vunpack.c.l.b16 %v1602
    %v1621 = vunpack.c.h.b16 %v1602
    %v1622 = vunpack.c.l.b16 %v1603
    %v1623 = vunpack.c.h.b16 %v1603
    %v1624 = vunpack.c.l.b16 %v1604
    %v1625 = vunpack.c.h.b16 %v1604
    %v1626 = vunpack.c.l.b16 %v1605
    %v1627 = vunpack.c.h.b16 %v1605
    %v1628 = vunpack.c.l.b16 %v1606
    %v1629 = vunpack.c.h.b16 %v1606
    %v1630 = vunpack.c.l.b16 %v1607
    %v1631 = vunpack.c.h.b16 %v1607
    %v1632 = vpack.c.b16 %v1624, %v1616
    %v1633 = vpack.c.b16 %v1625, %v1617
    %v1634 = vpack.c.b16 %v1626, %v1618
    %v1635 = vpack.c.b16 %v1627, %v1619
    %v1636 = vpack.c.b16 %v1628, %v1620
    %v1637 = vpack.c.b16 %v1629, %v1621
    %v1638 = vpack.c.b16 %v1630, %v1622
    %v1639 = vpack.c.b16 %v1631, %v1623
    %1648 = vmatprep.subr.bf16.mxu0 %v725
    %1649 = vmatpush1.bf16.msra.mxu0 %v724
    %1650 = vmatprep.subr.bf16.mxu0 %v723
    %1651 = vmatpush1.bf16.msra.mxu0 %v722
    %1652 = vmatprep.subr.bf16.mxu0 %v721
    %1653 = vmatpush1.bf16.msra.mxu0 %v720
    %1654 = vmatprep.subr.bf16.mxu0 %v719
    %1655 = vmatpush1.bf16.msra.mxu0 %v718
    %1656 = vmatprep.subr.bf16.mxu0 %v717
    %1657 = vmatpush1.bf16.msra.mxu0 %v716
    %1658 = vmatprep.subr.bf16.mxu0 %v715
    %1659 = vmatpush1.bf16.msra.mxu0 %v714
    %1660 = vmatprep.subr.bf16.mxu0 %v713
    %1661 = vmatpush1.bf16.msra.mxu0 %v712
    %1662 = vmatprep.subr.bf16.mxu0 %v711
    %1663 = vmatpush1.bf16.msra.mxu0 %v710
    %1664 = vmatprep.subr.bf16.mxu0 %v741
    %1665 = vmatpush2.bf16.msra.mxu0 %v740
    %1666 = vmatprep.subr.bf16.mxu0 %v739
    %1667 = vmatpush2.bf16.msra.mxu0 %v738
    %1668 = vmatprep.subr.bf16.mxu0 %v737
    %1669 = vmatpush2.bf16.msra.mxu0 %v736
    %1670 = vmatprep.subr.bf16.mxu0 %v735
    %1671 = vmatpush2.bf16.msra.mxu0 %v734
    %1672 = vmatprep.subr.bf16.mxu0 %v733
    %1673 = vmatpush2.bf16.msra.mxu0 %v732
    %1674 = vmatprep.subr.bf16.mxu0 %v731
    %1675 = vmatpush2.bf16.msra.mxu0 %v730
    %1676 = vmatprep.subr.bf16.mxu0 %v729
    %1677 = vmatpush2.bf16.msra.mxu0 %v728
    %1678 = vmatprep.subr.bf16.mxu0 %v727
    %1679 = vmatpush2.bf16.msra.mxu0 %v726
    %1680 = vmatprep.mubr.bf16.mxu0 %v1633
    %1681 = vmatmul.mubr.bf16.gmra.mxu0 %v1632
    %v1682 = vpop.f32.mrf.mxu0
    %v1683 = vadd.f32 %v279, %v1682
    %v1684 = vpop.f32.mrf.mxu0
    %v1685 = vadd.f32 %v283, %v1684
    %v1686 = vpop.f32.mrf.mxu0
    %v1687 = vadd.f32 %v279, %v1686
    %v1688 = vpop.f32.mrf.mxu0
    %v1689 = vadd.f32 %v283, %v1688
    %1690 = vdwg.mxu0
    %1691 = vmatprep.subr.bf16.mxu0 %v757
    %1692 = vmatpush1.bf16.msra.mxu0 %v756
    %1693 = vmatprep.subr.bf16.mxu0 %v755
    %1694 = vmatpush1.bf16.msra.mxu0 %v754
    %1695 = vmatprep.subr.bf16.mxu0 %v753
    %1696 = vmatpush1.bf16.msra.mxu0 %v752
    %1697 = vmatprep.subr.bf16.mxu0 %v751
    %1698 = vmatpush1.bf16.msra.mxu0 %v750
    %1699 = vmatprep.subr.bf16.mxu0 %v749
    %1700 = vmatpush1.bf16.msra.mxu0 %v748
    %1701 = vmatprep.subr.bf16.mxu0 %v747
    %1702 = vmatpush1.bf16.msra.mxu0 %v746
    %1703 = vmatprep.subr.bf16.mxu0 %v745
    %1704 = vmatpush1.bf16.msra.mxu0 %v744
    %1705 = vmatprep.subr.bf16.mxu0 %v743
    %1706 = vmatpush1.bf16.msra.mxu0 %v742
    %1707 = vmatprep.subr.bf16.mxu0 %v773
    %1708 = vmatpush2.bf16.msra.mxu0 %v772
    %1709 = vmatprep.subr.bf16.mxu0 %v771
    %1710 = vmatpush2.bf16.msra.mxu0 %v770
    %1711 = vmatprep.subr.bf16.mxu0 %v769
    %1712 = vmatpush2.bf16.msra.mxu0 %v768
    %1713 = vmatprep.subr.bf16.mxu0 %v767
    %1714 = vmatpush2.bf16.msra.mxu0 %v766
    %1715 = vmatprep.subr.bf16.mxu0 %v765
    %1716 = vmatpush2.bf16.msra.mxu0 %v764
    %1717 = vmatprep.subr.bf16.mxu0 %v763
    %1718 = vmatpush2.bf16.msra.mxu0 %v762
    %1719 = vmatprep.subr.bf16.mxu0 %v761
    %1720 = vmatpush2.bf16.msra.mxu0 %v760
    %1721 = vmatprep.subr.bf16.mxu0 %v759
    %1722 = vmatpush2.bf16.msra.mxu0 %v758
    %1723 = vmatprep.mubr.bf16.mxu0 %v1635
    %1724 = vmatmul.mubr.bf16.gmra.mxu0 %v1634
    %v1725 = vpop.f32.mrf.mxu0
    %v1726 = vadd.f32 %v1683, %v1725
    %v1727 = vpop.f32.mrf.mxu0
    %v1728 = vadd.f32 %v1685, %v1727
    %v1729 = vpop.f32.mrf.mxu0
    %v1730 = vadd.f32 %v1687, %v1729
    %v1731 = vpop.f32.mrf.mxu0
    %v1732 = vadd.f32 %v1689, %v1731
    %1733 = vdwg.mxu0
    %1734 = vmatprep.subr.bf16.mxu0 %v789
    %1735 = vmatpush1.bf16.msra.mxu0 %v788
    %1736 = vmatprep.subr.bf16.mxu0 %v787
    %1737 = vmatpush1.bf16.msra.mxu0 %v786
    %1738 = vmatprep.subr.bf16.mxu0 %v785
    %1739 = vmatpush1.bf16.msra.mxu0 %v784
    %1740 = vmatprep.subr.bf16.mxu0 %v783
    %1741 = vmatpush1.bf16.msra.mxu0 %v782
    %1742 = vmatprep.subr.bf16.mxu0 %v781
    %1743 = vmatpush1.bf16.msra.mxu0 %v780
    %1744 = vmatprep.subr.bf16.mxu0 %v779
    %1745 = vmatpush1.bf16.msra.mxu0 %v778
    %1746 = vmatprep.subr.bf16.mxu0 %v777
    %1747 = vmatpush1.bf16.msra.mxu0 %v776
    %1748 = vmatprep.subr.bf16.mxu0 %v775
    %1749 = vmatpush1.bf16.msra.mxu0 %v774
    %1750 = vmatprep.subr.bf16.mxu0 %v805
    %1751 = vmatpush2.bf16.msra.mxu0 %v804
    %1752 = vmatprep.subr.bf16.mxu0 %v803
    %1753 = vmatpush2.bf16.msra.mxu0 %v802
    %1754 = vmatprep.subr.bf16.mxu0 %v801
    %1755 = vmatpush2.bf16.msra.mxu0 %v800
    %1756 = vmatprep.subr.bf16.mxu0 %v799
    %1757 = vmatpush2.bf16.msra.mxu0 %v798
    %1758 = vmatprep.subr.bf16.mxu0 %v797
    %1759 = vmatpush2.bf16.msra.mxu0 %v796
    %1760 = vmatprep.subr.bf16.mxu0 %v795
    %1761 = vmatpush2.bf16.msra.mxu0 %v794
    %1762 = vmatprep.subr.bf16.mxu0 %v793
    %1763 = vmatpush2.bf16.msra.mxu0 %v792
    %1764 = vmatprep.subr.bf16.mxu0 %v791
    %1765 = vmatpush2.bf16.msra.mxu0 %v790
    %1766 = vmatprep.mubr.bf16.mxu0 %v1637
    %1767 = vmatmul.mubr.bf16.gmra.mxu0 %v1636
    %v1768 = vpop.f32.mrf.mxu0
    %v1769 = vadd.f32 %v1726, %v1768
    %v1770 = vpop.f32.mrf.mxu0
    %v1771 = vadd.f32 %v1728, %v1770
    %v1772 = vpop.f32.mrf.mxu0
    %v1773 = vadd.f32 %v1730, %v1772
    %v1774 = vpop.f32.mrf.mxu0
    %v1775 = vadd.f32 %v1732, %v1774
    %1776 = vdwg.mxu0
    %1777 = vmatprep.subr.bf16.mxu0 %v821
    %1778 = vmatpush1.bf16.msra.mxu0 %v820
    %1779 = vmatprep.subr.bf16.mxu0 %v819
    %1780 = vmatpush1.bf16.msra.mxu0 %v818
    %1781 = vmatprep.subr.bf16.mxu0 %v817
    %1782 = vmatpush1.bf16.msra.mxu0 %v816
    %1783 = vmatprep.subr.bf16.mxu0 %v815
    %1784 = vmatpush1.bf16.msra.mxu0 %v814
    %1785 = vmatprep.subr.bf16.mxu0 %v813
    %1786 = vmatpush1.bf16.msra.mxu0 %v812
    %1787 = vmatprep.subr.bf16.mxu0 %v811
    %1788 = vmatpush1.bf16.msra.mxu0 %v810
    %1789 = vmatprep.subr.bf16.mxu0 %v809
    %1790 = vmatpush1.bf16.msra.mxu0 %v808
    %1791 = vmatprep.subr.bf16.mxu0 %v807
    %1792 = vmatpush1.bf16.msra.mxu0 %v806
    %1793 = vmatprep.subr.bf16.mxu0 %v837
    %1794 = vmatpush2.bf16.msra.mxu0 %v836
    %1795 = vmatprep.subr.bf16.mxu0 %v835
    %1796 = vmatpush2.bf16.msra.mxu0 %v834
    %1797 = vmatprep.subr.bf16.mxu0 %v833
    %1798 = vmatpush2.bf16.msra.mxu0 %v832
    %1799 = vmatprep.subr.bf16.mxu0 %v831
    %1800 = vmatpush2.bf16.msra.mxu0 %v830
    %1801 = vmatprep.subr.bf16.mxu0 %v829
    %1802 = vmatpush2.bf16.msra.mxu0 %v828
    %1803 = vmatprep.subr.bf16.mxu0 %v827
    %1804 = vmatpush2.bf16.msra.mxu0 %v826
    %1805 = vmatprep.subr.bf16.mxu0 %v825
    %1806 = vmatpush2.bf16.msra.mxu0 %v824
    %1807 = vmatprep.subr.bf16.mxu0 %v823
    %1808 = vmatpush2.bf16.msra.mxu0 %v822
    %1809 = vmatprep.mubr.bf16.mxu0 %v1639
    %1810 = vmatmul.mubr.bf16.gmra.mxu0 %v1638
    %v1811 = vpop.f32.mrf.mxu0
    %v1812 = vadd.f32 %v1769, %v1811
    %v1813 = vpop.f32.mrf.mxu0
    %v1814 = vadd.f32 %v1771, %v1813
    %v1815 = vpop.f32.mrf.mxu0
    %v1816 = vadd.f32 %v1773, %v1815
    %v1817 = vpop.f32.mrf.mxu0
    %v1818 = vadd.f32 %v1775, %v1817
    %1819 = vdwg.mxu0
    %v1820 = vmax.f32 %v1812, 0.0
    %v1821 = vmax.f32 %v1814, 0.0
    %v1822 = vmax.f32 %v1816, 0.0
    %v1823 = vmax.f32 %v1818, 0.0
    %v1824 = vpack.c.bf16 %v1822, %v1820
    %v1825 = vld [vmem:[#allocation8] sm:$0xf]
    %v1826 = vld [vmem:[#allocation8 + $0x4] sm:$0xf]
    %v1827 = vld [vmem:[#allocation8 + $0x8] sm:$0xf]
    %v1828 = vld [vmem:[#allocation8 + $0xc] sm:$0xf]
    %v1829 = vld [vmem:[#allocation8 + $0x10] sm:$0xf]
    %v1830 = vld [vmem:[#allocation8 + $0x14] sm:$0xf]
    %v1831 = vld [vmem:[#allocation8 + $0x18] sm:$0xf]
    %v1832 = vld [vmem:[#allocation8 + $0x1c] sm:$0xf]
    %v1833 = vld [vmem:[#allocation8 + $0x20] sm:$0xf]
    %v1834 = vld [vmem:[#allocation8 + $0x24] sm:$0xf]
    %v1835 = vld [vmem:[#allocation8 + $0x28] sm:$0xf]
    %v1836 = vld [vmem:[#allocation8 + $0x2c] sm:$0xf]
    %v1837 = vld [vmem:[#allocation8 + $0x30] sm:$0xf]
    %v1838 = vld [vmem:[#allocation8 + $0x34] sm:$0xf]
    %v1839 = vld [vmem:[#allocation8 + $0x38] sm:$0xf]
    %v1840 = vld [vmem:[#allocation8 + $0x3c] sm:$0xf]
    %v1841 = vld [vmem:[%s5] sm:$0x1]
    %v1843 = vlaneseq
    %v1844 = vshrl.u32 %v1843, 7
    %v1845 = vsub.s32 0, %v1844
    %v1846 = vrot.slane %v1841, %v1845
    %v1864 = vunpack.c.l.b16 %v1825
    %v1865 = vunpack.c.l.b16 %v1826
    %v1866 = vunpack.c.l.b16 %v1827
    %v1867 = vunpack.c.l.b16 %v1828
    %v1868 = vunpack.c.l.b16 %v1829
    %v1869 = vunpack.c.l.b16 %v1830
    %v1870 = vunpack.c.l.b16 %v1831
    %v1871 = vunpack.c.l.b16 %v1832
    %v1872 = vunpack.c.l.b16 %v1833
    %v1873 = vunpack.c.l.b16 %v1834
    %v1874 = vunpack.c.l.b16 %v1835
    %v1875 = vunpack.c.l.b16 %v1836
    %v1876 = vunpack.c.l.b16 %v1837
    %v1877 = vunpack.c.l.b16 %v1838
    %v1878 = vunpack.c.l.b16 %v1839
    %v1879 = vunpack.c.l.b16 %v1840
    %v1880 = vpack.c.b16 %v1865, %v1864
    %v1881 = vpack.c.b16 %v1867, %v1866
    %v1882 = vpack.c.b16 %v1869, %v1868
    %v1883 = vpack.c.b16 %v1871, %v1870
    %v1884 = vpack.c.b16 %v1873, %v1872
    %v1885 = vpack.c.b16 %v1875, %v1874
    %v1886 = vpack.c.b16 %v1877, %v1876
    %v1887 = vpack.c.b16 %v1879, %v1878
    %1896 = vmatprep.subr.bf16.mxu0 0
    %1897 = vmatpush1.bf16.msra.mxu0 %v1887
    %1898 = vmatprep.subr.bf16.mxu0 0
    %1899 = vmatpush1.bf16.msra.mxu0 %v1886
    %1900 = vmatprep.subr.bf16.mxu0 0
    %1901 = vmatpush1.bf16.msra.mxu0 %v1885
    %1902 = vmatprep.subr.bf16.mxu0 0
    %1903 = vmatpush1.bf16.msra.mxu0 %v1884
    %1904 = vmatprep.subr.bf16.mxu0 0
    %1905 = vmatpush1.bf16.msra.mxu0 %v1883
    %1906 = vmatprep.subr.bf16.mxu0 0
    %1907 = vmatpush1.bf16.msra.mxu0 %v1882
    %1908 = vmatprep.subr.bf16.mxu0 0
    %1909 = vmatpush1.bf16.msra.mxu0 %v1881
    %1910 = vmatprep.subr.bf16.mxu0 0
    %1911 = vmatpush1.bf16.msra.mxu0 %v1880
    %1912 = vmatprep.subr.bf16.mxu0 0
    %1913 = vmatpush2.bf16.msra.mxu0 0
    %1914 = vmatprep.subr.bf16.mxu0 0
    %1915 = vmatpush2.bf16.msra.mxu0 0
    %1916 = vmatprep.subr.bf16.mxu0 0
    %1917 = vmatpush2.bf16.msra.mxu0 0
    %1918 = vmatprep.subr.bf16.mxu0 0
    %1919 = vmatpush2.bf16.msra.mxu0 0
    %1920 = vmatprep.subr.bf16.mxu0 0
    %1921 = vmatpush2.bf16.msra.mxu0 0
    %1922 = vmatprep.subr.bf16.mxu0 0
    %1923 = vmatpush2.bf16.msra.mxu0 0
    %1924 = vmatprep.subr.bf16.mxu0 0
    %1925 = vmatpush2.bf16.msra.mxu0 0
    %1926 = vmatprep.subr.bf16.mxu0 0
    %1927 = vmatpush2.bf16.msra.mxu0 0
    %1928 = vmatprep.mubr.bf16.mxu0 0
    %1929 = vmatmul.mubr.bf16.gmra.mxu0 %v1824
    %v1930 = vpop.f32.mrf.mxu0
    %v1931 = vadd.f32 %v1846, %v1930
    %v1932 = vpop.f32.mrf.mxu0
    %v1933 = vpop.f32.mrf.mxu0
    %v1934 = vadd.f32 %v1846, %v1933
    %v1935 = vpop.f32.mrf.mxu0
    %1936 = vdwg.mxu0
    %v1937 = vpack.c.bf16 %v1934, %v1931
    %v1938 = vld [vmem:[#allocation10] sm:$0xf]
    %v1939 = vld [vmem:[#allocation10 + $0x4] sm:$0xf]
    %v1940 = vld [vmem:[#allocation10 + $0x8] sm:$0xf]
    %v1941 = vld [vmem:[#allocation10 + $0xc] sm:$0xf]
    %v1942 = vld [vmem:[#allocation10 + $0x10] sm:$0xf]
    %v1943 = vld [vmem:[#allocation10 + $0x14] sm:$0xf]
    %v1944 = vld [vmem:[#allocation10 + $0x18] sm:$0xf]
    %v1945 = vld [vmem:[#allocation10 + $0x1c] sm:$0xf]
    %v1946 = vld [vmem:[#allocation10 + $0x20] sm:$0xf]
    %v1947 = vld [vmem:[#allocation10 + $0x24] sm:$0xf]
    %v1948 = vld [vmem:[#allocation10 + $0x28] sm:$0xf]
    %v1949 = vld [vmem:[#allocation10 + $0x2c] sm:$0xf]
    %v1950 = vld [vmem:[#allocation10 + $0x30] sm:$0xf]
    %v1951 = vld [vmem:[#allocation10 + $0x34] sm:$0xf]
    %v1952 = vld [vmem:[#allocation10 + $0x38] sm:$0xf]
    %v1953 = vld [vmem:[#allocation10 + $0x3c] sm:$0xf]
    %v1954 = vld [vmem:[%s7] sm:$0x1]
    %v1956 = vlaneseq
    %v1957 = vshrl.u32 %v1956, 7
    %v1958 = vsub.s32 0, %v1957
    %v1959 = vrot.slane %v1954, %v1958
    %v1977 = vunpack.c.l.b16 %v1938
    %v1978 = vunpack.c.l.b16 %v1939
    %v1979 = vunpack.c.l.b16 %v1940
    %v1980 = vunpack.c.l.b16 %v1941
    %v1981 = vunpack.c.l.b16 %v1942
    %v1982 = vunpack.c.l.b16 %v1943
    %v1983 = vunpack.c.l.b16 %v1944
    %v1984 = vunpack.c.l.b16 %v1945
    %v1985 = vunpack.c.l.b16 %v1946
    %v1986 = vunpack.c.l.b16 %v1947
    %v1987 = vunpack.c.l.b16 %v1948
    %v1988 = vunpack.c.l.b16 %v1949
    %v1989 = vunpack.c.l.b16 %v1950
    %v1990 = vunpack.c.l.b16 %v1951
    %v1991 = vunpack.c.l.b16 %v1952
    %v1992 = vunpack.c.l.b16 %v1953
    %v1993 = vpack.c.b16 %v1978, %v1977
    %v1994 = vpack.c.b16 %v1980, %v1979
    %v1995 = vpack.c.b16 %v1982, %v1981
    %v1996 = vpack.c.b16 %v1984, %v1983
    %v1997 = vpack.c.b16 %v1986, %v1985
    %v1998 = vpack.c.b16 %v1988, %v1987
    %v1999 = vpack.c.b16 %v1990, %v1989
    %v2000 = vpack.c.b16 %v1992, %v1991
    %2009 = vmatprep.subr.bf16.mxu0 0
    %2010 = vmatpush1.bf16.msra.mxu0 %v2000
    %2011 = vmatprep.subr.bf16.mxu0 0
    %2012 = vmatpush1.bf16.msra.mxu0 %v1999
    %2013 = vmatprep.subr.bf16.mxu0 0
    %2014 = vmatpush1.bf16.msra.mxu0 %v1998
    %2015 = vmatprep.subr.bf16.mxu0 0
    %2016 = vmatpush1.bf16.msra.mxu0 %v1997
    %2017 = vmatprep.subr.bf16.mxu0 0
    %2018 = vmatpush1.bf16.msra.mxu0 %v1996
    %2019 = vmatprep.subr.bf16.mxu0 0
    %2020 = vmatpush1.bf16.msra.mxu0 %v1995
    %2021 = vmatprep.subr.bf16.mxu0 0
    %2022 = vmatpush1.bf16.msra.mxu0 %v1994
    %2023 = vmatprep.subr.bf16.mxu0 0
    %2024 = vmatpush1.bf16.msra.mxu0 %v1993
    %2025 = vmatprep.subr.bf16.mxu0 0
    %2026 = vmatpush2.bf16.msra.mxu0 0
    %2027 = vmatprep.subr.bf16.mxu0 0
    %2028 = vmatpush2.bf16.msra.mxu0 0
    %2029 = vmatprep.subr.bf16.mxu0 0
    %2030 = vmatpush2.bf16.msra.mxu0 0
    %2031 = vmatprep.subr.bf16.mxu0 0
    %2032 = vmatpush2.bf16.msra.mxu0 0
    %2033 = vmatprep.subr.bf16.mxu0 0
    %2034 = vmatpush2.bf16.msra.mxu0 0
    %2035 = vmatprep.subr.bf16.mxu0 0
    %2036 = vmatpush2.bf16.msra.mxu0 0
    %2037 = vmatprep.subr.bf16.mxu0 0
    %2038 = vmatpush2.bf16.msra.mxu0 0
    %2039 = vmatprep.subr.bf16.mxu0 0
    %2040 = vmatpush2.bf16.msra.mxu0 0
    %2041 = vmatprep.mubr.bf16.mxu0 0
    %2042 = vmatmul.mubr.bf16.gmra.mxu0 %v1937
    %v2043 = vpop.f32.mrf.mxu0
    %v2044 = vadd.f32 %v1959, %v2043
    %v2045 = vpop.f32.mrf.mxu0
    %v2046 = vpop.f32.mrf.mxu0
    %v2047 = vadd.f32 %v1959, %v2046
    %v2048 = vpop.f32.mrf.mxu0
    %2049 = vdwg.mxu0
    %v2050 = vmax.f32 %v2044, 0.0
    %v2051 = vmax.f32 %v2047, 0.0
    %v2052 = vpack.c.bf16 %v2051, %v2050
    %v2053 = vld [vmem:[#allocation11] sm:$0xf]
    %v2054 = vld [vmem:[#allocation11 + $0x4] sm:$0xf]
    %v2055 = vld [vmem:[#allocation11 + $0x8] sm:$0xf]
    %v2056 = vld [vmem:[#allocation11 + $0xc] sm:$0xf]
    %v2057 = vld [vmem:[#allocation11 + $0x10] sm:$0xf]
    %v2058 = vld [vmem:[#allocation11 + $0x14] sm:$0xf]
    %v2059 = vld [vmem:[#allocation11 + $0x18] sm:$0xf]
    %v2060 = vld [vmem:[#allocation11 + $0x1c] sm:$0xf]
    %v2061 = vld [vmem:[#allocation11 + $0x20] sm:$0xf]
    %v2062 = vld [vmem:[#allocation11 + $0x24] sm:$0xf]
    %v2063 = vld [vmem:[#allocation11 + $0x28] sm:$0xf]
    %v2064 = vld [vmem:[#allocation11 + $0x2c] sm:$0xf]
    %v2065 = vld [vmem:[#allocation11 + $0x30] sm:$0xf]
    %v2066 = vld [vmem:[#allocation11 + $0x34] sm:$0xf]
    %v2067 = vld [vmem:[#allocation11 + $0x38] sm:$0xf]
    %v2068 = vld [vmem:[#allocation11 + $0x3c] sm:$0xf]
    %v2069 = vld [vmem:[%s9] sm:$0x1]
    %v2071 = vlaneseq
    %v2072 = vshrl.u32 %v2071, 7
    %v2073 = vsub.s32 0, %v2072
    %v2074 = vrot.slane %v2069, %v2073
    %v2092 = vunpack.c.l.b16 %v2053
    %v2093 = vunpack.c.l.b16 %v2054
    %v2094 = vunpack.c.l.b16 %v2055
    %v2095 = vunpack.c.l.b16 %v2056
    %v2096 = vunpack.c.l.b16 %v2057
    %v2097 = vunpack.c.l.b16 %v2058
    %v2098 = vunpack.c.l.b16 %v2059
    %v2099 = vunpack.c.l.b16 %v2060
    %v2100 = vunpack.c.l.b16 %v2061
    %v2101 = vunpack.c.l.b16 %v2062
    %v2102 = vunpack.c.l.b16 %v2063
    %v2103 = vunpack.c.l.b16 %v2064
    %v2104 = vunpack.c.l.b16 %v2065
    %v2105 = vunpack.c.l.b16 %v2066
    %v2106 = vunpack.c.l.b16 %v2067
    %v2107 = vunpack.c.l.b16 %v2068
    %v2108 = vpack.c.b16 %v2093, %v2092
    %v2109 = vpack.c.b16 %v2095, %v2094
    %v2110 = vpack.c.b16 %v2097, %v2096
    %v2111 = vpack.c.b16 %v2099, %v2098
    %v2112 = vpack.c.b16 %v2101, %v2100
    %v2113 = vpack.c.b16 %v2103, %v2102
    %v2114 = vpack.c.b16 %v2105, %v2104
    %v2115 = vpack.c.b16 %v2107, %v2106
    %2124 = vmatprep.subr.bf16.mxu0 0
    %2125 = vmatpush1.bf16.msra.mxu0 %v2115
    %2126 = vmatprep.subr.bf16.mxu0 0
    %2127 = vmatpush1.bf16.msra.mxu0 %v2114
    %2128 = vmatprep.subr.bf16.mxu0 0
    %2129 = vmatpush1.bf16.msra.mxu0 %v2113
    %2130 = vmatprep.subr.bf16.mxu0 0
    %2131 = vmatpush1.bf16.msra.mxu0 %v2112
    %2132 = vmatprep.subr.bf16.mxu0 0
    %2133 = vmatpush1.bf16.msra.mxu0 %v2111
    %2134 = vmatprep.subr.bf16.mxu0 0
    %2135 = vmatpush1.bf16.msra.mxu0 %v2110
    %2136 = vmatprep.subr.bf16.mxu0 0
    %2137 = vmatpush1.bf16.msra.mxu0 %v2109
    %2138 = vmatprep.subr.bf16.mxu0 0
    %2139 = vmatpush1.bf16.msra.mxu0 %v2108
    %2140 = vmatprep.subr.bf16.mxu0 0
    %2141 = vmatpush2.bf16.msra.mxu0 0
    %2142 = vmatprep.subr.bf16.mxu0 0
    %2143 = vmatpush2.bf16.msra.mxu0 0
    %2144 = vmatprep.subr.bf16.mxu0 0
    %2145 = vmatpush2.bf16.msra.mxu0 0
    %2146 = vmatprep.subr.bf16.mxu0 0
    %2147 = vmatpush2.bf16.msra.mxu0 0
    %2148 = vmatprep.subr.bf16.mxu0 0
    %2149 = vmatpush2.bf16.msra.mxu0 0
    %2150 = vmatprep.subr.bf16.mxu0 0
    %2151 = vmatpush2.bf16.msra.mxu0 0
    %2152 = vmatprep.subr.bf16.mxu0 0
    %2153 = vmatpush2.bf16.msra.mxu0 0
    %2154 = vmatprep.subr.bf16.mxu0 0
    %2155 = vmatpush2.bf16.msra.mxu0 0
    %2156 = vmatprep.mubr.bf16.mxu0 0
    %2157 = vmatmul.mubr.bf16.gmra.mxu0 %v2052
    %v2158 = vpop.f32.mrf.mxu0
    %v2159 = vadd.f32 %v2074, %v2158
    %v2160 = vpop.f32.mrf.mxu0
    %v2161 = vpop.f32.mrf.mxu0
    %v2162 = vadd.f32 %v2074, %v2161
    %v2163 = vpop.f32.mrf.mxu0
    %2164 = vdwg.mxu0
    %v2165 = vpack.c.bf16 %v1823, %v1821
    %v2166 = vld [vmem:[#allocation13] sm:$0xf]
    %v2167 = vld [vmem:[#allocation13 + $0x4] sm:$0xf]
    %v2168 = vld [vmem:[#allocation13 + $0x8] sm:$0xf]
    %v2169 = vld [vmem:[#allocation13 + $0xc] sm:$0xf]
    %v2170 = vld [vmem:[#allocation13 + $0x10] sm:$0xf]
    %v2171 = vld [vmem:[#allocation13 + $0x14] sm:$0xf]
    %v2172 = vld [vmem:[#allocation13 + $0x18] sm:$0xf]
    %v2173 = vld [vmem:[#allocation13 + $0x1c] sm:$0xf]
    %v2174 = vld [vmem:[#allocation13 + $0x20] sm:$0xf]
    %v2175 = vld [vmem:[#allocation13 + $0x24] sm:$0xf]
    %v2176 = vld [vmem:[#allocation13 + $0x28] sm:$0xf]
    %v2177 = vld [vmem:[#allocation13 + $0x2c] sm:$0xf]
    %v2178 = vld [vmem:[#allocation13 + $0x30] sm:$0xf]
    %v2179 = vld [vmem:[#allocation13 + $0x34] sm:$0xf]
    %v2180 = vld [vmem:[#allocation13 + $0x38] sm:$0xf]
    %v2181 = vld [vmem:[#allocation13 + $0x3c] sm:$0xf]
    %v2182 = vld [vmem:[%s11] sm:$0x1]
    %v2184 = vlaneseq
    %v2185 = vshrl.u32 %v2184, 7
    %v2186 = vsub.s32 0, %v2185
    %v2187 = vrot.slane %v2182, %v2186
    %v2205 = vunpack.c.l.b16 %v2166
    %v2206 = vunpack.c.l.b16 %v2167
    %v2207 = vunpack.c.l.b16 %v2168
    %v2208 = vunpack.c.l.b16 %v2169
    %v2209 = vunpack.c.l.b16 %v2170
    %v2210 = vunpack.c.l.b16 %v2171
    %v2211 = vunpack.c.l.b16 %v2172
    %v2212 = vunpack.c.l.b16 %v2173
    %v2213 = vunpack.c.l.b16 %v2174
    %v2214 = vunpack.c.l.b16 %v2175
    %v2215 = vunpack.c.l.b16 %v2176
    %v2216 = vunpack.c.l.b16 %v2177
    %v2217 = vunpack.c.l.b16 %v2178
    %v2218 = vunpack.c.l.b16 %v2179
    %v2219 = vunpack.c.l.b16 %v2180
    %v2220 = vunpack.c.l.b16 %v2181
    %v2221 = vpack.c.b16 %v2206, %v2205
    %v2222 = vpack.c.b16 %v2208, %v2207
    %v2223 = vpack.c.b16 %v2210, %v2209
    %v2224 = vpack.c.b16 %v2212, %v2211
    %v2225 = vpack.c.b16 %v2214, %v2213
    %v2226 = vpack.c.b16 %v2216, %v2215
    %v2227 = vpack.c.b16 %v2218, %v2217
    %v2228 = vpack.c.b16 %v2220, %v2219
    %2237 = vmatprep.subr.bf16.mxu0 0
    %2238 = vmatpush1.bf16.msra.mxu0 %v2228
    %2239 = vmatprep.subr.bf16.mxu0 0
    %2240 = vmatpush1.bf16.msra.mxu0 %v2227
    %2241 = vmatprep.subr.bf16.mxu0 0
    %2242 = vmatpush1.bf16.msra.mxu0 %v2226
    %2243 = vmatprep.subr.bf16.mxu0 0
    %2244 = vmatpush1.bf16.msra.mxu0 %v2225
    %2245 = vmatprep.subr.bf16.mxu0 0
    %2246 = vmatpush1.bf16.msra.mxu0 %v2224
    %2247 = vmatprep.subr.bf16.mxu0 0
    %2248 = vmatpush1.bf16.msra.mxu0 %v2223
    %2249 = vmatprep.subr.bf16.mxu0 0
    %2250 = vmatpush1.bf16.msra.mxu0 %v2222
    %2251 = vmatprep.subr.bf16.mxu0 0
    %2252 = vmatpush1.bf16.msra.mxu0 %v2221
    %2253 = vmatprep.subr.bf16.mxu0 0
    %2254 = vmatpush2.bf16.msra.mxu0 0
    %2255 = vmatprep.subr.bf16.mxu0 0
    %2256 = vmatpush2.bf16.msra.mxu0 0
    %2257 = vmatprep.subr.bf16.mxu0 0
    %2258 = vmatpush2.bf16.msra.mxu0 0
    %2259 = vmatprep.subr.bf16.mxu0 0
    %2260 = vmatpush2.bf16.msra.mxu0 0
    %2261 = vmatprep.subr.bf16.mxu0 0
    %2262 = vmatpush2.bf16.msra.mxu0 0
    %2263 = vmatprep.subr.bf16.mxu0 0
    %2264 = vmatpush2.bf16.msra.mxu0 0
    %2265 = vmatprep.subr.bf16.mxu0 0
    %2266 = vmatpush2.bf16.msra.mxu0 0
    %2267 = vmatprep.subr.bf16.mxu0 0
    %2268 = vmatpush2.bf16.msra.mxu0 0
    %2269 = vmatprep.mubr.bf16.mxu0 0
    %2270 = vmatmul.mubr.bf16.gmra.mxu0 %v2165
    %v2271 = vpop.f32.mrf.mxu0
    %v2272 = vadd.f32 %v2187, %v2271
    %v2273 = vpop.f32.mrf.mxu0
    %v2274 = vpop.f32.mrf.mxu0
    %v2275 = vadd.f32 %v2187, %v2274
    %v2276 = vpop.f32.mrf.mxu0
    %2277 = vdwg.mxu0
    %2278 = vst [vmem:[#allocation14 + $0x10] sm:$0xff] %v2159
    %2279 = vst [vmem:[#allocation14 + $0x30] sm:$0xff] %v2162
    %2280 = vst [vmem:[#allocation14 + $0x18] sm:$0xff] %v2272
    %2281 = vst [vmem:[#allocation14 + $0x38] sm:$0xff] %v2275
    // Predicated region
    $region78: #{tpu_custom_call.1} parent=1 // pred_check
      _
    $region79: #{tpu_custom_call.1} parent=1 // pred_check_branch
      %2283 = sbr.rel (0) target = $region81
    $region80: #{tpu_custom_call.1} parent=1 // pred_region
      %s2285 = ssub.s32 1024, 1024
      %2286 = vsyncadd [#allocation4], %s2285
      %s2287 = sshll.u32 [#allocation14], 4
      %s2288 = int_to_ptr.vmem [resolvable:$true] %s2287
      %2293 = dma.vmem_to_hbm [thread:$0]  %s2288, 1024, %s12, [#allocation4], 512, 512, 32
    $region81: #{tpu_custom_call.1} parent=1 // pred_fallthru
      _
    // Predicated region
    $region82: #{tpu_custom_call.1} parent=1 // pred_check
      _
    $region83: #{tpu_custom_call.1} parent=1 // pred_check_branch
      %2295 = sbr.rel (0) target = $region85
    $region84: #{tpu_custom_call.1} parent=1 // pred_region
      %2296 = dma.done [#allocation4], 1024
    $region85: #{tpu_custom_call.1} parent=1 // pred_fallthru
      _
    %2297 = vsyncpa [#allocation3], 1
    %2298 = vsyncpa [#allocation6], 1
    %2299 = vsyncpa [#allocation9], 1
    %2300 = vsyncpa [#allocation12], 1
    %2301 = vsyncpa [#allocation4], 1

</llo_original>
